<compile_context>
chip_gen: v5e
topology: v5e:2x2
jax: 0.10.0
libtpu: 0.0.40
codegen_flags: <defaults>
</compile_context>

<pallas_src>
import jax
import jax.numpy as jnp
from jax.experimental import pallas as pl
from jax.experimental.pallas import tpu as pltpu

LANE = 128
SUBLANE = 8


def _round_up(n, m):
    return ((n + m - 1) // m) * m


def mlp_kernel(x_ref, w1_ref, b1_ref, w2_ref, b2_ref, w3_ref, b3_ref, o_ref):
    # Layer 1: Linear(input_dim, 64->padded 128) + ReLU  (f32 accumulation)
    h1 = jnp.dot(x_ref[...], w1_ref[...], preferred_element_type=jnp.float32)
    h1 = jnp.maximum(h1 + b1_ref[...], 0.0)
    # Layer 2: Linear(64, 32->padded 128) + ReLU
    h2 = jnp.dot(h1.astype(w2_ref.dtype), w2_ref[...],
                 preferred_element_type=jnp.float32)
    h2 = jnp.maximum(h2 + b2_ref[...], 0.0)
    # Layer 3: Linear(32, nc->padded 128), no activation
    out = jnp.dot(h2.astype(w3_ref.dtype), w3_ref[...],
                  preferred_element_type=jnp.float32)
    o_ref[...] = (out + b3_ref[...]).astype(o_ref.dtype)


def reference_forward(x, params, compute_dtype=jnp.float32):
    """Plain-jnp forward (also the small-batch fast path)."""
    w1, b1, w2, b2, w3, b3 = params
    cd = compute_dtype
    h = jnp.dot(x.astype(cd), w1.astype(cd),
                preferred_element_type=jnp.float32) + b1
    h = jnp.maximum(h, 0.0)
    h = jnp.dot(h.astype(cd), w2.astype(cd),
                preferred_element_type=jnp.float32) + b2
    h = jnp.maximum(h, 0.0)
    return jnp.dot(h.astype(cd), w3.astype(cd),
                   preferred_element_type=jnp.float32) + b3


def my_clf_forward(x, params, *, batch_tile=512, min_pallas_batch=256,
                   compute_dtype=jnp.bfloat16, vmem_budget_bytes=24 << 20):
    """Fused MLP forward. x: (B, input_dim) float32. Returns (B, num_classes) f32."""
    w1, b1, w2, b2, w3, b3 = params
    B, input_dim = x.shape
    nc = w3.shape[1]

    # Fast path: for tiny batches the pallas_call launch + single-step pipeline
    # overhead exceeds the whole MLP's work; let XLA fuse it.
    if B < min_pallas_batch:
        return reference_forward(x, params, jnp.float32)

    # Pad hidden / output widths up to lane-dense multiples of 128. Zero weight
    # columns/rows and zero biases are inert through Linear+ReLU, so math is
    # unchanged; we slice [:, :nc] at the end.
    h1p = _round_up(w1.shape[1], LANE)
    h2p = _round_up(w2.shape[1], LANE)
    ncp = _round_up(nc, LANE)

    def pad2(a, rows, cols):
        return jnp.pad(a, ((0, rows - a.shape[0]), (0, cols - a.shape[1])))

    w1p = pad2(w1, input_dim, h1p).astype(compute_dtype)
    b1p = pad2(b1, 1, h1p).astype(jnp.float32)
    w2p = pad2(w2, h1p, h2p).astype(compute_dtype)
    b2p = pad2(b2, 1, h2p).astype(jnp.float32)
    w3p = pad2(w3, h2p, ncp).astype(compute_dtype)
    b3p = pad2(b3, 1, ncp).astype(jnp.float32)

    # Pick the batch tile: as large as requested, but capped so the
    # double-buffered x tile + output + intermediates + weights stay well inside
    # the scoped-VMEM budget (conservative so it also fits v7x's 64 MiB VMEM).
    wbytes = jnp.dtype(compute_dtype).itemsize

    def tile_vmem(t):
        x_buf = 2 * t * input_dim * wbytes            # double-buffered x tile
        out_buf = 2 * t * ncp * 4                     # double-buffered f32 out
        inter = 2 * t * max(h1p, h2p) * 4             # h1/h2 f32 intermediates
        wts = 2 * (input_dim * h1p + h1p * h2p + h2p * ncp) * wbytes
        return x_buf + out_buf + inter + wts

    tile = _round_up(min(batch_tile, _round_up(B, SUBLANE)), SUBLANE)
    while tile > SUBLANE and tile_vmem(tile) > vmem_budget_bytes:
        tile = _round_up(max(tile // 2, SUBLANE), SUBLANE)

    # Ragged batch: zero-pad to a multiple of the tile (padded rows sliced off).
    Bp = _round_up(B, tile)
    xp = x.astype(compute_dtype)
    if Bp != B:
        xp = jnp.pad(xp, ((0, Bp - B), (0, 0)))

    grid = (Bp // tile,)
    vmem_limit = int(min(max(32 << 20, int(tile_vmem(tile) * 1.5)), 64 << 20))

    full = lambda shape: pl.BlockSpec(shape, lambda i: (0, 0))

    out = pl.pallas_call(
        mlp_kernel,
        out_shape=jax.ShapeDtypeStruct((Bp, ncp), jnp.float32),
        grid_spec=pltpu.PrefetchScalarGridSpec(
            num_scalar_prefetch=0,
            grid=grid,
            in_specs=[
                pl.BlockSpec((tile, input_dim), lambda i: (i, 0)),  # x tile
                full((input_dim, h1p)), full((1, h1p)),
                full((h1p, h2p)),       full((1, h2p)),
                full((h2p, ncp)),       full((1, ncp)),
            ],
            out_specs=pl.BlockSpec((tile, ncp), lambda i: (i, 0)),
        ),
        compiler_params=pltpu.CompilerParams(
            dimension_semantics=("parallel",),
            vmem_limit_bytes=vmem_limit),
    )(xp, w1p, b1p, w2p, b2p, w3p, b3p)

    return out[:B, :nc]


def init_params(key, input_dim, num_classes=2):
    """Deterministic init mimicking nn.Linear's uniform(-1/sqrt(fan_in), +1/sqrt(fan_in))."""
    dims = [(input_dim, 64), (64, 32), (32, num_classes)]
    params = []
    for (fan_in, fan_out) in dims:
        key, kw, kb = jax.random.split(key, 3)
        bound = 1.0 / jnp.sqrt(fan_in)
        w = jax.random.uniform(kw, (fan_in, fan_out), jnp.float32, -bound, bound)
        b = jax.random.uniform(kb, (1, fan_out), jnp.float32, -bound, bound)
        params += [w, b]
    return tuple(params)


if __name__ == "__main__":
    key = jax.random.PRNGKey(0)
    kx1, kx2, kp = jax.random.split(key, 3)

    input_dim, num_classes = 32, 2
    params = init_params(kp, input_dim, num_classes)

    # 1) Pallas path: ragged batch (1000 -> padded to 1024, tile 512, grid=(2,)),
    #    bf16 compute with f32 accumulation.
    B = 1000
    x = jax.random.normal(kx1, (B, input_dim), jnp.float32)
    out = jax.block_until_ready(my_clf_forward(x, params))
    assert out.shape == (B, num_classes)
    ref_bf16 = reference_forward(x, params, jnp.bfloat16)  # same bf16 path
    ref_f32 = reference_forward(x, params, jnp.float32)    # PyTorch-equivalent f32
    assert jnp.allclose(out, ref_bf16, atol=2e-2, rtol=2e-2)
    assert jnp.allclose(out, ref_f32, atol=1e-1, rtol=1e-1)

    # 2) Small-batch fast path (skips Pallas; launch overhead > work at B=8).
    x_small = jax.random.normal(kx2, (8, input_dim), jnp.float32)
    out_small = jax.block_until_ready(my_clf_forward(x_small, params))
    ref_small = reference_forward(x_small, params, jnp.float32)
    assert out_small.shape == (8, num_classes)
    assert jnp.allclose(out_small, ref_small, atol=1e-5, rtol=1e-5)

    print("KERNEL_OK")
</pallas_src>

<mosaic_0001>
module attributes {stable_mosaic.version = 11 : i64} {
  func.func @mlp_kernel(%arg0: i32, %arg1: memref<512x32xbf16, #tpu.memory_space<vmem>>, %arg2: memref<32x128xbf16, #tpu.memory_space<vmem>>, %arg3: memref<1x128xf32, #tpu.memory_space<vmem>>, %arg4: memref<128x128xbf16, #tpu.memory_space<vmem>>, %arg5: memref<1x128xf32, #tpu.memory_space<vmem>>, %arg6: memref<128x128xbf16, #tpu.memory_space<vmem>>, %arg7: memref<1x128xf32, #tpu.memory_space<vmem>>, %arg8: memref<512x128xf32, #tpu.memory_space<vmem>>) attributes {dimension_semantics = [#tpu.dimension_semantics<parallel>], iteration_bounds = array<i64: 2>, scalar_prefetch = 0 : i64, scratch_operands = 0 : i64, tpu.core_type = #tpu.core_type<tc>, window_params = [{transform_indices = @transform_0, window_bounds = array<i64: 512, 32>}, {pipeline_mode = #tpu.pipeline_mode<synchronous>, transform_indices = @transform_1, window_bounds = array<i64: 32, 128>}, {pipeline_mode = #tpu.pipeline_mode<synchronous>, transform_indices = @transform_2, window_bounds = array<i64: 1, 128>}, {pipeline_mode = #tpu.pipeline_mode<synchronous>, transform_indices = @transform_3, window_bounds = array<i64: 128, 128>}, {pipeline_mode = #tpu.pipeline_mode<synchronous>, transform_indices = @transform_4, window_bounds = array<i64: 1, 128>}, {pipeline_mode = #tpu.pipeline_mode<synchronous>, transform_indices = @transform_5, window_bounds = array<i64: 128, 128>}, {pipeline_mode = #tpu.pipeline_mode<synchronous>, transform_indices = @transform_6, window_bounds = array<i64: 1, 128>}, {transform_indices = @transform_7, window_bounds = array<i64: 512, 128>}]} {
    %c0 = arith.constant 0 : index
    %c0_0 = arith.constant 0 : index
    %0 = vector.load %arg1[%c0, %c0_0] : memref<512x32xbf16, #tpu.memory_space<vmem>>, vector<512x32xbf16>
    %c0_1 = arith.constant 0 : index
    %c0_2 = arith.constant 0 : index
    %1 = vector.load %arg2[%c0_1, %c0_2] : memref<32x128xbf16, #tpu.memory_space<vmem>>, vector<32x128xbf16>
    %cst = arith.constant dense<0.000000e+00> : vector<512x128xf32>
    %2 = tpu.matmul %0, %1, %cst {dimension_numbers = #tpu.dot_dimension_numbers<[1], [0], [0], [1], [0, 0, 1, 1], [], []>} : vector<512x32xbf16>, vector<32x128xbf16>, vector<512x128xf32> -> vector<512x128xf32>
    %c0_3 = arith.constant 0 : index
    %c0_4 = arith.constant 0 : index
    %3 = vector.load %arg3[%c0_3, %c0_4] : memref<1x128xf32, #tpu.memory_space<vmem>>, vector<1x128xf32>
    %4 = vector.broadcast %3 : vector<1x128xf32> to vector<512x128xf32>
    %5 = arith.addf %2, %4 : vector<512x128xf32>
    %cst_5 = arith.constant 0.000000e+00 : f32
    %6 = vector.broadcast %cst_5 : f32 to vector<512x128xf32>
    %7 = arith.maximumf %5, %6 : vector<512x128xf32>
    %8 = arith.truncf %7 : vector<512x128xf32> to vector<512x128xbf16>
    %c0_6 = arith.constant 0 : index
    %c0_7 = arith.constant 0 : index
    %9 = vector.load %arg4[%c0_6, %c0_7] : memref<128x128xbf16, #tpu.memory_space<vmem>>, vector<128x128xbf16>
    %cst_8 = arith.constant dense<0.000000e+00> : vector<512x128xf32>
    %10 = tpu.matmul %8, %9, %cst_8 {dimension_numbers = #tpu.dot_dimension_numbers<[1], [0], [0], [1], [0, 0, 1, 1], [], []>} : vector<512x128xbf16>, vector<128x128xbf16>, vector<512x128xf32> -> vector<512x128xf32>
    %c0_9 = arith.constant 0 : index
    %c0_10 = arith.constant 0 : index
    %11 = vector.load %arg5[%c0_9, %c0_10] : memref<1x128xf32, #tpu.memory_space<vmem>>, vector<1x128xf32>
    %12 = vector.broadcast %11 : vector<1x128xf32> to vector<512x128xf32>
    %13 = arith.addf %10, %12 : vector<512x128xf32>
    %cst_11 = arith.constant 0.000000e+00 : f32
    %14 = vector.broadcast %cst_11 : f32 to vector<512x128xf32>
    %15 = arith.maximumf %13, %14 : vector<512x128xf32>
    %16 = arith.truncf %15 : vector<512x128xf32> to vector<512x128xbf16>
    %c0_12 = arith.constant 0 : index
    %c0_13 = arith.constant 0 : index
    %17 = vector.load %arg6[%c0_12, %c0_13] : memref<128x128xbf16, #tpu.memory_space<vmem>>, vector<128x128xbf16>
    %cst_14 = arith.constant dense<0.000000e+00> : vector<512x128xf32>
    %18 = tpu.matmul %16, %17, %cst_14 {dimension_numbers = #tpu.dot_dimension_numbers<[1], [0], [0], [1], [0, 0, 1, 1], [], []>} : vector<512x128xbf16>, vector<128x128xbf16>, vector<512x128xf32> -> vector<512x128xf32>
    %c0_15 = arith.constant 0 : index
    %c0_16 = arith.constant 0 : index
    %19 = vector.load %arg7[%c0_15, %c0_16] : memref<1x128xf32, #tpu.memory_space<vmem>>, vector<1x128xf32>
    %20 = vector.broadcast %19 : vector<1x128xf32> to vector<512x128xf32>
    %21 = arith.addf %18, %20 : vector<512x128xf32>
    %c0_17 = arith.constant 0 : index
    %c0_18 = arith.constant 0 : index
    %22 = vector.load %arg8[%c0_17, %c0_18] : memref<512x128xf32, #tpu.memory_space<vmem>>, vector<512x128xf32>
    tpu.vector_store %arg8[%c0_17, %c0_18], %21 {strides = array<i32>} : memref<512x128xf32, #tpu.memory_space<vmem>>, vector<512x128xf32>,
    return
  }
  func.func @transform_0(%arg0: i32) -> (i32, i32) {
    %c0_i32 = arith.constant 0 : i32
    %c0_i32_0 = arith.constant 0 : i32
    return %arg0, %c0_i32 : i32, i32
  }
  func.func @transform_1(%arg0: i32) -> (i32, i32) {
    %c0_i32 = arith.constant 0 : i32
    %c0_i32_0 = arith.constant 0 : i32
    %c0_i32_1 = arith.constant 0 : i32
    return %c0_i32, %c0_i32_0 : i32, i32
  }
  func.func @transform_2(%arg0: i32) -> (i32, i32) {
    %c0_i32 = arith.constant 0 : i32
    %c0_i32_0 = arith.constant 0 : i32
    %c0_i32_1 = arith.constant 0 : i32
    return %c0_i32, %c0_i32_0 : i32, i32
  }
  func.func @transform_3(%arg0: i32) -> (i32, i32) {
    %c0_i32 = arith.constant 0 : i32
    %c0_i32_0 = arith.constant 0 : i32
    %c0_i32_1 = arith.constant 0 : i32
    return %c0_i32, %c0_i32_0 : i32, i32
  }
  func.func @transform_4(%arg0: i32) -> (i32, i32) {
    %c0_i32 = arith.constant 0 : i32
    %c0_i32_0 = arith.constant 0 : i32
    %c0_i32_1 = arith.constant 0 : i32
    return %c0_i32, %c0_i32_0 : i32, i32
  }
  func.func @transform_5(%arg0: i32) -> (i32, i32) {
    %c0_i32 = arith.constant 0 : i32
    %c0_i32_0 = arith.constant 0 : i32
    %c0_i32_1 = arith.constant 0 : i32
    return %c0_i32, %c0_i32_0 : i32, i32
  }
  func.func @transform_6(%arg0: i32) -> (i32, i32) {
    %c0_i32 = arith.constant 0 : i32
    %c0_i32_0 = arith.constant 0 : i32
    %c0_i32_1 = arith.constant 0 : i32
    return %c0_i32, %c0_i32_0 : i32, i32
  }
  func.func @transform_7(%arg0: i32) -> (i32, i32) {
    %c0_i32 = arith.constant 0 : i32
    %c0_i32_0 = arith.constant 0 : i32
    return %arg0, %c0_i32 : i32, i32
  }
}

</mosaic_0001>

<llo_original>
// kernel: tpu_custom_call.1
$region0: #{tpu_custom_call.1}
  #allocation0 [shape = 'u32[]', space=smem, size = 0x4, offset = 0x4, fixed_abs, tag = 'smem constant byte address 0x4 - core index']
  #allocation1 [shape = 'u32[72,128]{1,0:T(1,128)}', space=vmem, size = 0x9000, scoped, tag = 'internal scratch']
  %s0 = inlined_call_operand.vmem [shape: bf16[1024,32], index: 0, kind: input, shape index: {}]
  %s1 = inlined_call_operand.vmem [shape: bf16[32,128], index: 1, kind: input, shape index: {}]
  %s2 = inlined_call_operand.vmem [shape: f32[1,128], index: 2, kind: input, shape index: {}]
  %s3 = inlined_call_operand.vmem [shape: bf16[128,128], index: 3, kind: input, shape index: {}]
  %s4 = inlined_call_operand.vmem [shape: f32[1,128], index: 4, kind: input, shape index: {}]
  %s5 = inlined_call_operand.vmem [shape: bf16[128,128], index: 5, kind: input, shape index: {}]
  %s6 = inlined_call_operand.vmem [shape: f32[1,128], index: 6, kind: input, shape index: {}]
  %s7 = inlined_call_operand.hbm [shape: f32[1024,128], index: 7, kind: output, shape index: {}]
  %s8 = sld [smem:[#allocation0]]
  $region61: #{tpu_custom_call.1} parent=0
    _
  %s10 = ssub.s32 1, %s8
  %s11 = scalar_select 0, %s10, %s8
  $region1: #{tpu_custom_call.1} parent=0
    #allocation2 [shape = 'u8[524288]{0}', space=vmem, size = 0x80000, scoped, tag = 'output window, operand 0']
    #allocation3 [shape = 's32[2]{0}', space=sflag, size = 0x8, scoped, tag = 'scoped memory for tpu_custom_call.1']
    %12 = vsyncpa [#allocation3], 0
    %s13 = scalar_lea.sflag [#allocation3], 1
    %14 = vsyncpa %s13, 0
    loop: start=0, step=1, limit=4
    $region2: #{tpu_custom_call.1} parent=1 // loop_pre_header
      _
    $region3: #{tpu_custom_call.1} parent=1 // loop_header
      %s16 = sphi 0, %s20
      %p17 = scmp.ge.s32.totalorder %s16, 4
      %s26 = sphi 0, %s28
      %s29 = sphi 0, %s26
      %s30 = sphi 0, %s29
      %s46 = sphi 0, %s30
      %s50 = sphi 0, %s50
      %s52 = sphi 0, %s50
      %s53 = sphi 0, %s52
      %s67 = sphi 0, %s53
      %s71 = sphi 0, %s71
      %s73 = sphi 0, %s71
      %s74 = sphi 0, %s73
      %s88 = sphi 0, %s74
      %s92 = sphi 0, %s92
      %s94 = sphi 0, %s92
      %s95 = sphi 0, %s94
      %s109 = sphi 0, %s95
      %s113 = sphi 0, %s113
      %s115 = sphi 0, %s113
      %s116 = sphi 0, %s115
      %s130 = sphi 0, %s116
      %s134 = sphi 0, %s134
      %s136 = sphi 0, %s134
      %s137 = sphi 0, %s136
      %s151 = sphi 0, %s137
      %s155 = sphi 0, %s155
      %s157 = sphi 0, %s155
      %s158 = sphi 0, %s157
      %s172 = sphi 0, %s158
      %s178 = sphi 0, %s180
      %s181 = sphi 0, %s178
      %s182 = sphi 0, %s181
      %s198 = sphi 0, %s182
    $region4: #{tpu_custom_call.1} parent=1 // loop_header_branch
      %19 = sbr.rel (%p17) target = $region8
    $region5: #{tpu_custom_call.1} parent=1 // loop_body
      %s21 = ssub.s32 %s16, 1
      %s22 = ssub.s32 %s16, 2
      %s23 = sadd.s32 %s16, 1
      %s24 = ssub.s32 %s16, %s23
      %p25 = scmp.eq.s32.totalorder %s24, 0
      %s27 = sadd.s32 %s26, 1
      %s28 = scalar_select %p25, %s26, %s27
      %p31 = pneg %p25
      %p32 = scmp.eq.s32.totalorder %s16, 1
      %p33 = por %p31, %p32
      %p34 = scmp.ne.s32.totalorder %s26, %s29
      %p35 = scmp.eq.s32.totalorder %s16, 0
      %p36 = por %p34, %p35
      %p37 = scmp.ne.s32.totalorder %s26, %s29
      %p38 = scmp.eq.s32.totalorder %s21, 1
      %p39 = por %p37, %p38
      %p40 = scmp.ne.s32.totalorder %s29, %s30
      %p41 = scmp.eq.s32.totalorder %s21, 0
      %p42 = por %p40, %p41
      %p43 = scmp.ne.s32.totalorder %s29, %s30
      %p44 = scmp.eq.s32.totalorder %s22, 1
      %p45 = por %p43, %p44
      %p47 = scmp.ne.s32.totalorder %s30, %s46
      %p48 = scmp.eq.s32.totalorder %s22, 0
      %p49 = por %p47, %p48
      %s51 = sadd.s32 %s50, 1
      %p54 = scmp.eq.s32.totalorder %s16, 1
      %p55 = scmp.ne.s32.totalorder %s50, %s52
      %p56 = scmp.eq.s32.totalorder %s16, 0
      %p57 = por %p55, %p56
      %p58 = scmp.ne.s32.totalorder %s50, %s52
      %p59 = scmp.eq.s32.totalorder %s21, 1
      %p60 = por %p58, %p59
      %p61 = scmp.ne.s32.totalorder %s52, %s53
      %p62 = scmp.eq.s32.totalorder %s21, 0
      %p63 = por %p61, %p62
      %p64 = scmp.ne.s32.totalorder %s52, %s53
      %p65 = scmp.eq.s32.totalorder %s22, 1
      %p66 = por %p64, %p65
      %p68 = scmp.ne.s32.totalorder %s53, %s67
      %p69 = scmp.eq.s32.totalorder %s22, 0
      %p70 = por %p68, %p69
      %s72 = sadd.s32 %s71, 1
      %p75 = scmp.eq.s32.totalorder %s16, 1
      %p76 = scmp.ne.s32.totalorder %s71, %s73
      %p77 = scmp.eq.s32.totalorder %s16, 0
      %p78 = por %p76, %p77
      %p79 = scmp.ne.s32.totalorder %s71, %s73
      %p80 = scmp.eq.s32.totalorder %s21, 1
      %p81 = por %p79, %p80
      %p82 = scmp.ne.s32.totalorder %s73, %s74
      %p83 = scmp.eq.s32.totalorder %s21, 0
      %p84 = por %p82, %p83
      %p85 = scmp.ne.s32.totalorder %s73, %s74
      %p86 = scmp.eq.s32.totalorder %s22, 1
      %p87 = por %p85, %p86
      %p89 = scmp.ne.s32.totalorder %s74, %s88
      %p90 = scmp.eq.s32.totalorder %s22, 0
      %p91 = por %p89, %p90
      %s93 = sadd.s32 %s92, 1
      %p96 = scmp.eq.s32.totalorder %s16, 1
      %p97 = scmp.ne.s32.totalorder %s92, %s94
      %p98 = scmp.eq.s32.totalorder %s16, 0
      %p99 = por %p97, %p98
      %p100 = scmp.ne.s32.totalorder %s92, %s94
      %p101 = scmp.eq.s32.totalorder %s21, 1
      %p102 = por %p100, %p101
      %p103 = scmp.ne.s32.totalorder %s94, %s95
      %p104 = scmp.eq.s32.totalorder %s21, 0
      %p105 = por %p103, %p104
      %p106 = scmp.ne.s32.totalorder %s94, %s95
      %p107 = scmp.eq.s32.totalorder %s22, 1
      %p108 = por %p106, %p107
      %p110 = scmp.ne.s32.totalorder %s95, %s109
      %p111 = scmp.eq.s32.totalorder %s22, 0
      %p112 = por %p110, %p111
      %s114 = sadd.s32 %s113, 1
      %p117 = scmp.eq.s32.totalorder %s16, 1
      %p118 = scmp.ne.s32.totalorder %s113, %s115
      %p119 = scmp.eq.s32.totalorder %s16, 0
      %p120 = por %p118, %p119
      %p121 = scmp.ne.s32.totalorder %s113, %s115
      %p122 = scmp.eq.s32.totalorder %s21, 1
      %p123 = por %p121, %p122
      %p124 = scmp.ne.s32.totalorder %s115, %s116
      %p125 = scmp.eq.s32.totalorder %s21, 0
      %p126 = por %p124, %p125
      %p127 = scmp.ne.s32.totalorder %s115, %s116
      %p128 = scmp.eq.s32.totalorder %s22, 1
      %p129 = por %p127, %p128
      %p131 = scmp.ne.s32.totalorder %s116, %s130
      %p132 = scmp.eq.s32.totalorder %s22, 0
      %p133 = por %p131, %p132
      %s135 = sadd.s32 %s134, 1
      %p138 = scmp.eq.s32.totalorder %s16, 1
      %p139 = scmp.ne.s32.totalorder %s134, %s136
      %p140 = scmp.eq.s32.totalorder %s16, 0
      %p141 = por %p139, %p140
      %p142 = scmp.ne.s32.totalorder %s134, %s136
      %p143 = scmp.eq.s32.totalorder %s21, 1
      %p144 = por %p142, %p143
      %p145 = scmp.ne.s32.totalorder %s136, %s137
      %p146 = scmp.eq.s32.totalorder %s21, 0
      %p147 = por %p145, %p146
      %p148 = scmp.ne.s32.totalorder %s136, %s137
      %p149 = scmp.eq.s32.totalorder %s22, 1
      %p150 = por %p148, %p149
      %p152 = scmp.ne.s32.totalorder %s137, %s151
      %p153 = scmp.eq.s32.totalorder %s22, 0
      %p154 = por %p152, %p153
      %s156 = sadd.s32 %s155, 1
      %p159 = scmp.eq.s32.totalorder %s16, 1
      %p160 = scmp.ne.s32.totalorder %s155, %s157
      %p161 = scmp.eq.s32.totalorder %s16, 0
      %p162 = por %p160, %p161
      %p163 = scmp.ne.s32.totalorder %s155, %s157
      %p164 = scmp.eq.s32.totalorder %s21, 1
      %p165 = por %p163, %p164
      %p166 = scmp.ne.s32.totalorder %s157, %s158
      %p167 = scmp.eq.s32.totalorder %s21, 0
      %p168 = por %p166, %p167
      %p169 = scmp.ne.s32.totalorder %s157, %s158
      %p170 = scmp.eq.s32.totalorder %s22, 1
      %p171 = por %p169, %p170
      %p173 = scmp.ne.s32.totalorder %s158, %s172
      %p174 = scmp.eq.s32.totalorder %s22, 0
      %p175 = por %p173, %p174
      %s176 = ssub.s32 %s16, %s23
      %p177 = scmp.eq.s32.totalorder %s176, 0
      %s179 = sadd.s32 %s178, 1
      %s180 = scalar_select %p177, %s178, %s179
      %p183 = pneg %p177
      %p184 = scmp.eq.s32.totalorder %s16, 1
      %p185 = por %p183, %p184
      %p186 = scmp.ne.s32.totalorder %s178, %s181
      %p187 = scmp.eq.s32.totalorder %s16, 0
      %p188 = por %p186, %p187
      %p189 = scmp.ne.s32.totalorder %s178, %s181
      %p190 = scmp.eq.s32.totalorder %s21, 1
      %p191 = por %p189, %p190
      %p192 = scmp.ne.s32.totalorder %s181, %s182
      %p193 = scmp.eq.s32.totalorder %s21, 0
      %p194 = por %p192, %p193
      %p195 = scmp.ne.s32.totalorder %s181, %s182
      %p196 = scmp.eq.s32.totalorder %s22, 1
      %p197 = por %p195, %p196
      %p199 = scmp.ne.s32.totalorder %s182, %s198
      %p200 = scmp.eq.s32.totalorder %s22, 0
      %p201 = por %p199, %p200
      %p202 = scmp.le.s32.totalorder 1, %s16
      %p203 = scmp.lt.s32.totalorder %s16, 3
      %p204 = pnand %p202, %p203
      %p205 = pneg %p204
      // Predicated region
      $region9: #{tpu_custom_call.1} parent=5 // pred_check
        _
      $region10: #{tpu_custom_call.1} parent=5 // pred_check_branch
        %207 = sbr.rel (%p204) target = $region12
      $region11: #{tpu_custom_call.1} parent=5 // pred_region
        %s208 = ssub.s32 %s16, 1
        // Predicated region
        $region13: #{tpu_custom_call.1} parent=11 // pred_check
          %p209 = pneg %p63
        $region14: #{tpu_custom_call.1} parent=11 // pred_check_branch
          %211 = sbr.rel (%p209) target = $region16
        $region15: #{tpu_custom_call.1} parent=11 // pred_region
          _
        $region16: #{tpu_custom_call.1} parent=11 // pred_fallthru
          _
        // Predicated region
        $region17: #{tpu_custom_call.1} parent=11 // pred_check
          %p212 = pneg %p84
        $region18: #{tpu_custom_call.1} parent=11 // pred_check_branch
          %214 = sbr.rel (%p212) target = $region20
        $region19: #{tpu_custom_call.1} parent=11 // pred_region
          _
        $region20: #{tpu_custom_call.1} parent=11 // pred_fallthru
          _
        // Predicated region
        $region21: #{tpu_custom_call.1} parent=11 // pred_check
          %p215 = pneg %p105
        $region22: #{tpu_custom_call.1} parent=11 // pred_check_branch
          %217 = sbr.rel (%p215) target = $region24
        $region23: #{tpu_custom_call.1} parent=11 // pred_region
          _
        $region24: #{tpu_custom_call.1} parent=11 // pred_fallthru
          _
        // Predicated region
        $region25: #{tpu_custom_call.1} parent=11 // pred_check
          %p218 = pneg %p126
        $region26: #{tpu_custom_call.1} parent=11 // pred_check_branch
          %220 = sbr.rel (%p218) target = $region28
        $region27: #{tpu_custom_call.1} parent=11 // pred_region
          _
        $region28: #{tpu_custom_call.1} parent=11 // pred_fallthru
          _
        // Predicated region
        $region29: #{tpu_custom_call.1} parent=11 // pred_check
          %p221 = pneg %p147
        $region30: #{tpu_custom_call.1} parent=11 // pred_check_branch
          %223 = sbr.rel (%p221) target = $region32
        $region31: #{tpu_custom_call.1} parent=11 // pred_region
          _
        $region32: #{tpu_custom_call.1} parent=11 // pred_fallthru
          _
        // Predicated region
        $region33: #{tpu_custom_call.1} parent=11 // pred_check
          %p224 = pneg %p168
        $region34: #{tpu_custom_call.1} parent=11 // pred_check_branch
          %226 = sbr.rel (%p224) target = $region36
        $region35: #{tpu_custom_call.1} parent=11 // pred_region
          _
        $region36: #{tpu_custom_call.1} parent=11 // pred_fallthru
          _
      $region12: #{tpu_custom_call.1} parent=5 // pred_fallthru
        _
      %p227 = scmp.lt.s32.totalorder %s16, 2
      // Predicated region
      $region37: #{tpu_custom_call.1} parent=5 // pred_check
        %p228 = pneg %p227
      $region38: #{tpu_custom_call.1} parent=5 // pred_check_branch
        %230 = sbr.rel (%p228) target = $region40
      $region39: #{tpu_custom_call.1} parent=5 // pred_region
        // Predicated region
        $region41: #{tpu_custom_call.1} parent=39 // pred_check
          %p231 = pneg %p36
        $region42: #{tpu_custom_call.1} parent=39 // pred_check_branch
          %233 = sbr.rel (%p231) target = $region44
        $region43: #{tpu_custom_call.1} parent=39 // pred_region
          %s234 = smul.u32 64, %s16
          %p235 = scmp.lt.s32.totalorder %s234, 127
          %s236 = scalar_select %p235, %s234, 127
          %s237 = smul.addr %s236, 4
          %s238 = scalar_lea.vmem %s0, %s237
          %s239 = smul.u32 64, %s16
        $region44: #{tpu_custom_call.1} parent=39 // pred_fallthru
          _
      $region40: #{tpu_custom_call.1} parent=5 // pred_fallthru
        _
      %p240 = scmp.le.s32.totalorder 1, %s16
      %p241 = scmp.lt.s32.totalorder %s16, 3
      %p242 = pnand %p240, %p241
      %p243 = pneg %p242
      // Predicated region
      $region45: #{tpu_custom_call.1} parent=5 // pred_check
        _
      $region46: #{tpu_custom_call.1} parent=5 // pred_check_branch
        %245 = sbr.rel (%p242) target = $region48
      $region47: #{tpu_custom_call.1} parent=5 // pred_region
        %s246 = ssub.s32 %s16, 1
        %s247 = smul.u32 64, %s21
        %p248 = scmp.lt.s32.totalorder %s247, 127
        %s249 = scalar_select %p248, %s247, 127
        %s250 = smul.addr %s249, 4
        %s251 = scalar_lea.vmem %s0, %s250
        %p252 = pneg %p42
        %p253 = pneg %p39
        %p254 = pneg %p63
        %p255 = pneg %p60
        %p256 = pneg %p84
        %p257 = pneg %p81
        %p258 = pneg %p105
        %p259 = pneg %p102
        %p260 = pneg %p126
        %p261 = pneg %p123
        %p262 = pneg %p147
        %p263 = pneg %p144
        %p264 = pneg %p168
        %p265 = pneg %p165
        %p266 = pneg %p194
        %p267 = pneg %p191
        %s268 = sand.u32 %s181, 1
        %s269 = scalar_lea.sflag [#allocation3], %s268
        %s270 = sand.u32 %s181, 1
        %s271 = smul.addr %s270, 512
        %s272 = scalar_lea.vmem [#allocation2], %s271
        %s273 = smul.u32 64, %s21
        %p274 = scmp.lt.s32.totalorder %s273, 127
        %s275 = scalar_select %p274, %s273, 127
        %s276 = smul.addr %s275, 4
        %s277 = scalar_lea.vmem %s0, %s276
        %s278 = smul.u32 64, %s21
        %s279 = smul.u32 64, %s21
        %v281 = vld [vmem:[%s277] sm:$0xf]
        %v282 = vld [vmem:[%s277 + $0x4] sm:$0xf]
        %v283 = vld [vmem:[%s277 + $0x8] sm:$0xf]
        %v284 = vld [vmem:[%s277 + $0xc] sm:$0xf]
        %v285 = vld [vmem:[%s277 + $0x10] sm:$0xf]
        %v286 = vld [vmem:[%s277 + $0x14] sm:$0xf]
        %v287 = vld [vmem:[%s277 + $0x18] sm:$0xf]
        %v288 = vld [vmem:[%s277 + $0x1c] sm:$0xf]
        %v289 = vld [vmem:[%s277 + $0x20] sm:$0xf]
        %v290 = vld [vmem:[%s277 + $0x24] sm:$0xf]
        %v291 = vld [vmem:[%s277 + $0x28] sm:$0xf]
        %v292 = vld [vmem:[%s277 + $0x2c] sm:$0xf]
        %v293 = vld [vmem:[%s277 + $0x30] sm:$0xf]
        %v294 = vld [vmem:[%s277 + $0x34] sm:$0xf]
        %v295 = vld [vmem:[%s277 + $0x38] sm:$0xf]
        %v296 = vld [vmem:[%s277 + $0x3c] sm:$0xf]
        %v297 = vld [vmem:[%s277 + $0x40] sm:$0xf]
        %v298 = vld [vmem:[%s277 + $0x44] sm:$0xf]
        %v299 = vld [vmem:[%s277 + $0x48] sm:$0xf]
        %v300 = vld [vmem:[%s277 + $0x4c] sm:$0xf]
        %v301 = vld [vmem:[%s277 + $0x50] sm:$0xf]
        %v302 = vld [vmem:[%s277 + $0x54] sm:$0xf]
        %v303 = vld [vmem:[%s277 + $0x58] sm:$0xf]
        %v304 = vld [vmem:[%s277 + $0x5c] sm:$0xf]
        %v305 = vld [vmem:[%s277 + $0x60] sm:$0xf]
        %v306 = vld [vmem:[%s277 + $0x64] sm:$0xf]
        %v307 = vld [vmem:[%s277 + $0x68] sm:$0xf]
        %v308 = vld [vmem:[%s277 + $0x6c] sm:$0xf]
        %v309 = vld [vmem:[%s277 + $0x70] sm:$0xf]
        %v310 = vld [vmem:[%s277 + $0x74] sm:$0xf]
        %v311 = vld [vmem:[%s277 + $0x78] sm:$0xf]
        %v312 = vld [vmem:[%s277 + $0x7c] sm:$0xf]
        %v313 = vld [vmem:[%s277 + $0x80] sm:$0xf]
        %v314 = vld [vmem:[%s277 + $0x84] sm:$0xf]
        %v315 = vld [vmem:[%s277 + $0x88] sm:$0xf]
        %v316 = vld [vmem:[%s277 + $0x8c] sm:$0xf]
        %v317 = vld [vmem:[%s277 + $0x90] sm:$0xf]
        %v318 = vld [vmem:[%s277 + $0x94] sm:$0xf]
        %v319 = vld [vmem:[%s277 + $0x98] sm:$0xf]
        %v320 = vld [vmem:[%s277 + $0x9c] sm:$0xf]
        %v321 = vld [vmem:[%s277 + $0xa0] sm:$0xf]
        %v322 = vld [vmem:[%s277 + $0xa4] sm:$0xf]
        %v323 = vld [vmem:[%s277 + $0xa8] sm:$0xf]
        %v324 = vld [vmem:[%s277 + $0xac] sm:$0xf]
        %v325 = vld [vmem:[%s277 + $0xb0] sm:$0xf]
        %v326 = vld [vmem:[%s277 + $0xb4] sm:$0xf]
        %v327 = vld [vmem:[%s277 + $0xb8] sm:$0xf]
        %v328 = vld [vmem:[%s277 + $0xbc] sm:$0xf]
        %v329 = vld [vmem:[%s277 + $0xc0] sm:$0xf]
        %v330 = vld [vmem:[%s277 + $0xc4] sm:$0xf]
        %v331 = vld [vmem:[%s277 + $0xc8] sm:$0xf]
        %v332 = vld [vmem:[%s277 + $0xcc] sm:$0xf]
        %v333 = vld [vmem:[%s277 + $0xd0] sm:$0xf]
        %v334 = vld [vmem:[%s277 + $0xd4] sm:$0xf]
        %v335 = vld [vmem:[%s277 + $0xd8] sm:$0xf]
        %v336 = vld [vmem:[%s277 + $0xdc] sm:$0xf]
        %v337 = vld [vmem:[%s277 + $0xe0] sm:$0xf]
        %v338 = vld [vmem:[%s277 + $0xe4] sm:$0xf]
        %v339 = vld [vmem:[%s277 + $0xe8] sm:$0xf]
        %v340 = vld [vmem:[%s277 + $0xec] sm:$0xf]
        %v341 = vld [vmem:[%s277 + $0xf0] sm:$0xf]
        %v342 = vld [vmem:[%s277 + $0xf4] sm:$0xf]
        %v343 = vld [vmem:[%s277 + $0xf8] sm:$0xf]
        %v344 = vld [vmem:[%s277 + $0xfc] sm:$0xf]
        %v345 = vld [vmem:[%s1] sm:$0xf]
        %v346 = vld [vmem:[%s1 + $0x4] sm:$0xf]
        %v347 = vld [vmem:[%s1 + $0x8] sm:$0xf]
        %v348 = vld [vmem:[%s1 + $0xc] sm:$0xf]
        %v349 = vld [vmem:[%s2] sm:$0x1]
        %v351 = vperm.slane %v349, 0
        %v417 = vunpack.c.l.b16 %v281
        %v418 = vunpack.c.l.b16 %v282
        %v419 = vunpack.c.l.b16 %v283
        %v420 = vunpack.c.l.b16 %v284
        %v421 = vunpack.c.l.b16 %v285
        %v422 = vunpack.c.l.b16 %v286
        %v423 = vunpack.c.l.b16 %v287
        %v424 = vunpack.c.l.b16 %v288
        %v425 = vunpack.c.l.b16 %v289
        %v426 = vunpack.c.l.b16 %v290
        %v427 = vunpack.c.l.b16 %v291
        %v428 = vunpack.c.l.b16 %v292
        %v429 = vunpack.c.l.b16 %v293
        %v430 = vunpack.c.l.b16 %v294
        %v431 = vunpack.c.l.b16 %v295
        %v432 = vunpack.c.l.b16 %v296
        %v433 = vunpack.c.l.b16 %v297
        %v434 = vunpack.c.l.b16 %v298
        %v435 = vunpack.c.l.b16 %v299
        %v436 = vunpack.c.l.b16 %v300
        %v437 = vunpack.c.l.b16 %v301
        %v438 = vunpack.c.l.b16 %v302
        %v439 = vunpack.c.l.b16 %v303
        %v440 = vunpack.c.l.b16 %v304
        %v441 = vunpack.c.l.b16 %v305
        %v442 = vunpack.c.l.b16 %v306
        %v443 = vunpack.c.l.b16 %v307
        %v444 = vunpack.c.l.b16 %v308
        %v445 = vunpack.c.l.b16 %v309
        %v446 = vunpack.c.l.b16 %v310
        %v447 = vunpack.c.l.b16 %v311
        %v448 = vunpack.c.l.b16 %v312
        %v449 = vunpack.c.l.b16 %v313
        %v450 = vunpack.c.l.b16 %v314
        %v451 = vunpack.c.l.b16 %v315
        %v452 = vunpack.c.l.b16 %v316
        %v453 = vunpack.c.l.b16 %v317
        %v454 = vunpack.c.l.b16 %v318
        %v455 = vunpack.c.l.b16 %v319
        %v456 = vunpack.c.l.b16 %v320
        %v457 = vunpack.c.l.b16 %v321
        %v458 = vunpack.c.l.b16 %v322
        %v459 = vunpack.c.l.b16 %v323
        %v460 = vunpack.c.l.b16 %v324
        %v461 = vunpack.c.l.b16 %v325
        %v462 = vunpack.c.l.b16 %v326
        %v463 = vunpack.c.l.b16 %v327
        %v464 = vunpack.c.l.b16 %v328
        %v465 = vunpack.c.l.b16 %v329
        %v466 = vunpack.c.l.b16 %v330
        %v467 = vunpack.c.l.b16 %v331
        %v468 = vunpack.c.l.b16 %v332
        %v469 = vunpack.c.l.b16 %v333
        %v470 = vunpack.c.l.b16 %v334
        %v471 = vunpack.c.l.b16 %v335
        %v472 = vunpack.c.l.b16 %v336
        %v473 = vunpack.c.l.b16 %v337
        %v474 = vunpack.c.l.b16 %v338
        %v475 = vunpack.c.l.b16 %v339
        %v476 = vunpack.c.l.b16 %v340
        %v477 = vunpack.c.l.b16 %v341
        %v478 = vunpack.c.l.b16 %v342
        %v479 = vunpack.c.l.b16 %v343
        %v480 = vunpack.c.l.b16 %v344
        %v481 = vpack.c.b16 %v418, %v417
        %v482 = vpack.c.b16 %v420, %v419
        %v483 = vpack.c.b16 %v422, %v421
        %v484 = vpack.c.b16 %v424, %v423
        %v485 = vpack.c.b16 %v426, %v425
        %v486 = vpack.c.b16 %v428, %v427
        %v487 = vpack.c.b16 %v430, %v429
        %v488 = vpack.c.b16 %v432, %v431
        %v489 = vpack.c.b16 %v434, %v433
        %v490 = vpack.c.b16 %v436, %v435
        %v491 = vpack.c.b16 %v438, %v437
        %v492 = vpack.c.b16 %v440, %v439
        %v493 = vpack.c.b16 %v442, %v441
        %v494 = vpack.c.b16 %v444, %v443
        %v495 = vpack.c.b16 %v446, %v445
        %v496 = vpack.c.b16 %v448, %v447
        %v497 = vpack.c.b16 %v450, %v449
        %v498 = vpack.c.b16 %v452, %v451
        %v499 = vpack.c.b16 %v454, %v453
        %v500 = vpack.c.b16 %v456, %v455
        %v501 = vpack.c.b16 %v458, %v457
        %v502 = vpack.c.b16 %v460, %v459
        %v503 = vpack.c.b16 %v462, %v461
        %v504 = vpack.c.b16 %v464, %v463
        %v505 = vpack.c.b16 %v466, %v465
        %v506 = vpack.c.b16 %v468, %v467
        %v507 = vpack.c.b16 %v470, %v469
        %v508 = vpack.c.b16 %v472, %v471
        %v509 = vpack.c.b16 %v474, %v473
        %v510 = vpack.c.b16 %v476, %v475
        %v511 = vpack.c.b16 %v478, %v477
        %v512 = vpack.c.b16 %v480, %v479
        %v517 = vunpack.c.l.b16 %v345
        %v518 = vunpack.c.l.b16 %v346
        %v519 = vunpack.c.l.b16 %v347
        %v520 = vunpack.c.l.b16 %v348
        %v521 = vpack.c.b16 %v518, %v517
        %v522 = vpack.c.b16 %v520, %v519
        %vm525 = vcmask 261120
        %v527 = vsel %vm525, %v481, 0
        %v530 = vsel %vm525, %v482, 0
        %v533 = vsel %vm525, %v483, 0
        %v536 = vsel %vm525, %v484, 0
        %v539 = vsel %vm525, %v485, 0
        %v542 = vsel %vm525, %v486, 0
        %v545 = vsel %vm525, %v487, 0
        %v548 = vsel %vm525, %v488, 0
        %v551 = vsel %vm525, %v489, 0
        %v554 = vsel %vm525, %v490, 0
        %v557 = vsel %vm525, %v491, 0
        %v560 = vsel %vm525, %v492, 0
        %v563 = vsel %vm525, %v493, 0
        %v566 = vsel %vm525, %v494, 0
        %v569 = vsel %vm525, %v495, 0
        %v572 = vsel %vm525, %v496, 0
        %v575 = vsel %vm525, %v497, 0
        %v578 = vsel %vm525, %v498, 0
        %v581 = vsel %vm525, %v499, 0
        %v584 = vsel %vm525, %v500, 0
        %v587 = vsel %vm525, %v501, 0
        %v590 = vsel %vm525, %v502, 0
        %v593 = vsel %vm525, %v503, 0
        %v596 = vsel %vm525, %v504, 0
        %v599 = vsel %vm525, %v505, 0
        %v602 = vsel %vm525, %v506, 0
        %v605 = vsel %vm525, %v507, 0
        %v608 = vsel %vm525, %v508, 0
        %v611 = vsel %vm525, %v509, 0
        %v614 = vsel %vm525, %v510, 0
        %v617 = vsel %vm525, %v511, 0
        %v620 = vsel %vm525, %v512, 0
        %622 = vmatpush.bf16.msra.mxu0 0
        %623 = vmatpush.bf16.msra.mxu0 0
        %624 = vmatpush.bf16.msra.mxu0 0
        %625 = vmatpush.bf16.msra.mxu0 0
        %626 = vmatpush.bf16.msra.mxu0 0
        %627 = vmatpush.bf16.msra.mxu0 0
        %628 = vmatpush.bf16.msra.mxu0 %v522
        %629 = vmatpush.bf16.msra.mxu0 %v521
        %630 = vmatmul.bf16.gmra.mxu0 %v527
        %v631 = vpop.f32.mrf.mxu0
        %v632 = vadd.f32 %v351, %v631
        %v633 = vpop.f32.mrf.mxu0
        %v634 = vadd.f32 %v351, %v633
        %635 = vmatmul.bf16.gmra.mxu0 %v530
        %v636 = vpop.f32.mrf.mxu0
        %v637 = vadd.f32 %v351, %v636
        %v638 = vpop.f32.mrf.mxu0
        %v639 = vadd.f32 %v351, %v638
        %640 = vmatmul.bf16.gmra.mxu0 %v533
        %v641 = vpop.f32.mrf.mxu0
        %v642 = vadd.f32 %v351, %v641
        %v643 = vpop.f32.mrf.mxu0
        %v644 = vadd.f32 %v351, %v643
        %645 = vmatmul.bf16.gmra.mxu0 %v536
        %v646 = vpop.f32.mrf.mxu0
        %v647 = vadd.f32 %v351, %v646
        %v648 = vpop.f32.mrf.mxu0
        %v649 = vadd.f32 %v351, %v648
        %650 = vmatmul.bf16.gmra.mxu0 %v539
        %v651 = vpop.f32.mrf.mxu0
        %v652 = vadd.f32 %v351, %v651
        %v653 = vpop.f32.mrf.mxu0
        %v654 = vadd.f32 %v351, %v653
        %655 = vmatmul.bf16.gmra.mxu0 %v542
        %v656 = vpop.f32.mrf.mxu0
        %v657 = vadd.f32 %v351, %v656
        %v658 = vpop.f32.mrf.mxu0
        %v659 = vadd.f32 %v351, %v658
        %660 = vmatmul.bf16.gmra.mxu0 %v545
        %v661 = vpop.f32.mrf.mxu0
        %v662 = vadd.f32 %v351, %v661
        %v663 = vpop.f32.mrf.mxu0
        %v664 = vadd.f32 %v351, %v663
        %665 = vmatmul.bf16.gmra.mxu0 %v548
        %v666 = vpop.f32.mrf.mxu0
        %v667 = vadd.f32 %v351, %v666
        %v668 = vpop.f32.mrf.mxu0
        %v669 = vadd.f32 %v351, %v668
        %670 = vmatmul.bf16.gmra.mxu0 %v551
        %v671 = vpop.f32.mrf.mxu0
        %v672 = vadd.f32 %v351, %v671
        %v673 = vpop.f32.mrf.mxu0
        %v674 = vadd.f32 %v351, %v673
        %675 = vmatmul.bf16.gmra.mxu0 %v554
        %v676 = vpop.f32.mrf.mxu0
        %v677 = vadd.f32 %v351, %v676
        %v678 = vpop.f32.mrf.mxu0
        %v679 = vadd.f32 %v351, %v678
        %680 = vmatmul.bf16.gmra.mxu0 %v557
        %v681 = vpop.f32.mrf.mxu0
        %v682 = vadd.f32 %v351, %v681
        %v683 = vpop.f32.mrf.mxu0
        %v684 = vadd.f32 %v351, %v683
        %685 = vmatmul.bf16.gmra.mxu0 %v560
        %v686 = vpop.f32.mrf.mxu0
        %v687 = vadd.f32 %v351, %v686
        %v688 = vpop.f32.mrf.mxu0
        %v689 = vadd.f32 %v351, %v688
        %690 = vmatmul.bf16.gmra.mxu0 %v563
        %v691 = vpop.f32.mrf.mxu0
        %v692 = vadd.f32 %v351, %v691
        %v693 = vpop.f32.mrf.mxu0
        %v694 = vadd.f32 %v351, %v693
        %695 = vmatmul.bf16.gmra.mxu0 %v566
        %v696 = vpop.f32.mrf.mxu0
        %v697 = vadd.f32 %v351, %v696
        %v698 = vpop.f32.mrf.mxu0
        %v699 = vadd.f32 %v351, %v698
        %700 = vmatmul.bf16.gmra.mxu0 %v569
        %v701 = vpop.f32.mrf.mxu0
        %v702 = vadd.f32 %v351, %v701
        %v703 = vpop.f32.mrf.mxu0
        %v704 = vadd.f32 %v351, %v703
        %705 = vmatmul.bf16.gmra.mxu0 %v572
        %v706 = vpop.f32.mrf.mxu0
        %v707 = vadd.f32 %v351, %v706
        %v708 = vpop.f32.mrf.mxu0
        %v709 = vadd.f32 %v351, %v708
        %710 = vmatmul.bf16.gmra.mxu0 %v575
        %v711 = vpop.f32.mrf.mxu0
        %v712 = vadd.f32 %v351, %v711
        %v713 = vpop.f32.mrf.mxu0
        %v714 = vadd.f32 %v351, %v713
        %715 = vmatmul.bf16.gmra.mxu0 %v578
        %v716 = vpop.f32.mrf.mxu0
        %v717 = vadd.f32 %v351, %v716
        %v718 = vpop.f32.mrf.mxu0
        %v719 = vadd.f32 %v351, %v718
        %720 = vmatmul.bf16.gmra.mxu0 %v581
        %v721 = vpop.f32.mrf.mxu0
        %v722 = vadd.f32 %v351, %v721
        %v723 = vpop.f32.mrf.mxu0
        %v724 = vadd.f32 %v351, %v723
        %725 = vmatmul.bf16.gmra.mxu0 %v584
        %v726 = vpop.f32.mrf.mxu0
        %v727 = vadd.f32 %v351, %v726
        %v728 = vpop.f32.mrf.mxu0
        %v729 = vadd.f32 %v351, %v728
        %730 = vmatmul.bf16.gmra.mxu0 %v587
        %v731 = vpop.f32.mrf.mxu0
        %v732 = vadd.f32 %v351, %v731
        %v733 = vpop.f32.mrf.mxu0
        %v734 = vadd.f32 %v351, %v733
        %735 = vmatmul.bf16.gmra.mxu0 %v590
        %v736 = vpop.f32.mrf.mxu0
        %v737 = vadd.f32 %v351, %v736
        %v738 = vpop.f32.mrf.mxu0
        %v739 = vadd.f32 %v351, %v738
        %740 = vmatmul.bf16.gmra.mxu0 %v593
        %v741 = vpop.f32.mrf.mxu0
        %v742 = vadd.f32 %v351, %v741
        %v743 = vpop.f32.mrf.mxu0
        %v744 = vadd.f32 %v351, %v743
        %745 = vmatmul.bf16.gmra.mxu0 %v596
        %v746 = vpop.f32.mrf.mxu0
        %v747 = vadd.f32 %v351, %v746
        %v748 = vpop.f32.mrf.mxu0
        %v749 = vadd.f32 %v351, %v748
        %750 = vmatmul.bf16.gmra.mxu0 %v599
        %v751 = vpop.f32.mrf.mxu0
        %v752 = vadd.f32 %v351, %v751
        %v753 = vpop.f32.mrf.mxu0
        %v754 = vadd.f32 %v351, %v753
        %755 = vmatmul.bf16.gmra.mxu0 %v602
        %v756 = vpop.f32.mrf.mxu0
        %v757 = vadd.f32 %v351, %v756
        %v758 = vpop.f32.mrf.mxu0
        %v759 = vadd.f32 %v351, %v758
        %760 = vmatmul.bf16.gmra.mxu0 %v605
        %v761 = vpop.f32.mrf.mxu0
        %v762 = vadd.f32 %v351, %v761
        %v763 = vpop.f32.mrf.mxu0
        %v764 = vadd.f32 %v351, %v763
        %765 = vmatmul.bf16.gmra.mxu0 %v608
        %v766 = vpop.f32.mrf.mxu0
        %v767 = vadd.f32 %v351, %v766
        %v768 = vpop.f32.mrf.mxu0
        %v769 = vadd.f32 %v351, %v768
        %770 = vmatmul.bf16.gmra.mxu0 %v611
        %v771 = vpop.f32.mrf.mxu0
        %v772 = vadd.f32 %v351, %v771
        %v773 = vpop.f32.mrf.mxu0
        %v774 = vadd.f32 %v351, %v773
        %775 = vmatmul.bf16.gmra.mxu0 %v614
        %v776 = vpop.f32.mrf.mxu0
        %v777 = vadd.f32 %v351, %v776
        %v778 = vpop.f32.mrf.mxu0
        %v779 = vadd.f32 %v351, %v778
        %780 = vmatmul.bf16.gmra.mxu0 %v617
        %v781 = vpop.f32.mrf.mxu0
        %v782 = vadd.f32 %v351, %v781
        %v783 = vpop.f32.mrf.mxu0
        %v784 = vadd.f32 %v351, %v783
        %785 = vmatmul.bf16.gmra.mxu0 %v620
        %v786 = vpop.f32.mrf.mxu0
        %v787 = vadd.f32 %v351, %v786
        %v788 = vpop.f32.mrf.mxu0
        %v789 = vadd.f32 %v351, %v788
        %790 = vdwg.mxu0
        %v791 = vmax.f32 %v632, 0.0
        %v792 = vmax.f32 %v634, 0.0
        %v793 = vmax.f32 %v637, 0.0
        %v794 = vmax.f32 %v639, 0.0
        %v795 = vmax.f32 %v642, 0.0
        %v796 = vmax.f32 %v644, 0.0
        %v797 = vmax.f32 %v647, 0.0
        %v798 = vmax.f32 %v649, 0.0
        %v799 = vmax.f32 %v652, 0.0
        %v800 = vmax.f32 %v654, 0.0
        %v801 = vmax.f32 %v657, 0.0
        %v802 = vmax.f32 %v659, 0.0
        %v803 = vmax.f32 %v662, 0.0
        %v804 = vmax.f32 %v664, 0.0
        %v805 = vmax.f32 %v667, 0.0
        %v806 = vmax.f32 %v669, 0.0
        %v807 = vmax.f32 %v672, 0.0
        %v808 = vmax.f32 %v674, 0.0
        %v809 = vmax.f32 %v677, 0.0
        %v810 = vmax.f32 %v679, 0.0
        %v811 = vmax.f32 %v682, 0.0
        %v812 = vmax.f32 %v684, 0.0
        %v813 = vmax.f32 %v687, 0.0
        %v814 = vmax.f32 %v689, 0.0
        %v815 = vmax.f32 %v692, 0.0
        %v816 = vmax.f32 %v694, 0.0
        %v817 = vmax.f32 %v697, 0.0
        %v818 = vmax.f32 %v699, 0.0
        %v819 = vmax.f32 %v702, 0.0
        %v820 = vmax.f32 %v704, 0.0
        %v821 = vmax.f32 %v707, 0.0
        %v822 = vmax.f32 %v709, 0.0
        %v823 = vmax.f32 %v712, 0.0
        %v824 = vmax.f32 %v714, 0.0
        %v825 = vmax.f32 %v717, 0.0
        %v826 = vmax.f32 %v719, 0.0
        %v827 = vmax.f32 %v722, 0.0
        %v828 = vmax.f32 %v724, 0.0
        %v829 = vmax.f32 %v727, 0.0
        %v830 = vmax.f32 %v729, 0.0
        %v831 = vmax.f32 %v732, 0.0
        %v832 = vmax.f32 %v734, 0.0
        %v833 = vmax.f32 %v737, 0.0
        %v834 = vmax.f32 %v739, 0.0
        %v835 = vmax.f32 %v742, 0.0
        %v836 = vmax.f32 %v744, 0.0
        %v837 = vmax.f32 %v747, 0.0
        %v838 = vmax.f32 %v749, 0.0
        %v839 = vmax.f32 %v752, 0.0
        %v840 = vmax.f32 %v754, 0.0
        %v841 = vmax.f32 %v757, 0.0
        %v842 = vmax.f32 %v759, 0.0
        %v843 = vmax.f32 %v762, 0.0
        %v844 = vmax.f32 %v764, 0.0
        %v845 = vmax.f32 %v767, 0.0
        %v846 = vmax.f32 %v769, 0.0
        %v847 = vmax.f32 %v772, 0.0
        %v848 = vmax.f32 %v774, 0.0
        %v849 = vmax.f32 %v777, 0.0
        %v850 = vmax.f32 %v779, 0.0
        %v851 = vmax.f32 %v782, 0.0
        %v852 = vmax.f32 %v784, 0.0
        %v853 = vmax.f32 %v787, 0.0
        %v854 = vmax.f32 %v789, 0.0
        %v855 = vpack.c.bf16 %v792, %v791
        %v856 = vpack.c.bf16 %v794, %v793
        %v857 = vpack.c.bf16 %v796, %v795
        %v858 = vpack.c.bf16 %v798, %v797
        %v859 = vpack.c.bf16 %v800, %v799
        %v860 = vpack.c.bf16 %v802, %v801
        %v861 = vpack.c.bf16 %v804, %v803
        %v862 = vpack.c.bf16 %v806, %v805
        %v863 = vpack.c.bf16 %v808, %v807
        %v864 = vpack.c.bf16 %v810, %v809
        %v865 = vpack.c.bf16 %v812, %v811
        %v866 = vpack.c.bf16 %v814, %v813
        %v867 = vpack.c.bf16 %v816, %v815
        %v868 = vpack.c.bf16 %v818, %v817
        %v869 = vpack.c.bf16 %v820, %v819
        %v870 = vpack.c.bf16 %v822, %v821
        %v871 = vpack.c.bf16 %v824, %v823
        %v872 = vpack.c.bf16 %v826, %v825
        %v873 = vpack.c.bf16 %v828, %v827
        %v874 = vpack.c.bf16 %v830, %v829
        %v875 = vpack.c.bf16 %v832, %v831
        %v876 = vpack.c.bf16 %v834, %v833
        %v877 = vpack.c.bf16 %v836, %v835
        %v878 = vpack.c.bf16 %v838, %v837
        %v879 = vpack.c.bf16 %v840, %v839
        %v880 = vpack.c.bf16 %v842, %v841
        %v881 = vpack.c.bf16 %v844, %v843
        %v882 = vpack.c.bf16 %v846, %v845
        %v883 = vpack.c.bf16 %v848, %v847
        %v884 = vpack.c.bf16 %v850, %v849
        %v885 = vpack.c.bf16 %v852, %v851
        %v886 = vpack.c.bf16 %v854, %v853
        %v887 = vld [vmem:[%s3] sm:$0xf]
        %v888 = vld [vmem:[%s3 + $0x4] sm:$0xf]
        %v889 = vld [vmem:[%s3 + $0x8] sm:$0xf]
        %v890 = vld [vmem:[%s3 + $0xc] sm:$0xf]
        %v891 = vld [vmem:[%s3 + $0x10] sm:$0xf]
        %v892 = vld [vmem:[%s3 + $0x14] sm:$0xf]
        %v893 = vld [vmem:[%s3 + $0x18] sm:$0xf]
        %v894 = vld [vmem:[%s3 + $0x1c] sm:$0xf]
        %v895 = vld [vmem:[%s3 + $0x20] sm:$0xf]
        %v896 = vld [vmem:[%s3 + $0x24] sm:$0xf]
        %v897 = vld [vmem:[%s3 + $0x28] sm:$0xf]
        %v898 = vld [vmem:[%s3 + $0x2c] sm:$0xf]
        %v899 = vld [vmem:[%s3 + $0x30] sm:$0xf]
        %v900 = vld [vmem:[%s3 + $0x34] sm:$0xf]
        %v901 = vld [vmem:[%s3 + $0x38] sm:$0xf]
        %v902 = vld [vmem:[%s3 + $0x3c] sm:$0xf]
        %v903 = vld [vmem:[%s4] sm:$0x1]
        %v905 = vperm.slane %v903, 0
        %v923 = vunpack.c.l.b16 %v887
        %v924 = vunpack.c.l.b16 %v888
        %v925 = vunpack.c.l.b16 %v889
        %v926 = vunpack.c.l.b16 %v890
        %v927 = vunpack.c.l.b16 %v891
        %v928 = vunpack.c.l.b16 %v892
        %v929 = vunpack.c.l.b16 %v893
        %v930 = vunpack.c.l.b16 %v894
        %v931 = vunpack.c.l.b16 %v895
        %v932 = vunpack.c.l.b16 %v896
        %v933 = vunpack.c.l.b16 %v897
        %v934 = vunpack.c.l.b16 %v898
        %v935 = vunpack.c.l.b16 %v899
        %v936 = vunpack.c.l.b16 %v900
        %v937 = vunpack.c.l.b16 %v901
        %v938 = vunpack.c.l.b16 %v902
        %v939 = vpack.c.b16 %v924, %v923
        %v940 = vpack.c.b16 %v926, %v925
        %v941 = vpack.c.b16 %v928, %v927
        %v942 = vpack.c.b16 %v930, %v929
        %v943 = vpack.c.b16 %v932, %v931
        %v944 = vpack.c.b16 %v934, %v933
        %v945 = vpack.c.b16 %v936, %v935
        %v946 = vpack.c.b16 %v938, %v937
        %955 = vmatpush.bf16.msra.mxu0 %v946
        %956 = vmatpush.bf16.msra.mxu0 %v945
        %957 = vmatpush.bf16.msra.mxu0 %v944
        %958 = vmatpush.bf16.msra.mxu0 %v943
        %959 = vmatpush.bf16.msra.mxu0 %v942
        %960 = vmatpush.bf16.msra.mxu0 %v941
        %961 = vmatpush.bf16.msra.mxu0 %v940
        %962 = vmatpush.bf16.msra.mxu0 %v939
        %963 = vmatmul.bf16.gmra.mxu0 %v855
        %v964 = vpop.f32.mrf.mxu0
        %v965 = vadd.f32 %v905, %v964
        %v966 = vpop.f32.mrf.mxu0
        %v967 = vadd.f32 %v905, %v966
        %968 = vmatmul.bf16.gmra.mxu0 %v856
        %v969 = vpop.f32.mrf.mxu0
        %v970 = vadd.f32 %v905, %v969
        %v971 = vpop.f32.mrf.mxu0
        %v972 = vadd.f32 %v905, %v971
        %973 = vmatmul.bf16.gmra.mxu0 %v857
        %v974 = vpop.f32.mrf.mxu0
        %v975 = vadd.f32 %v905, %v974
        %v976 = vpop.f32.mrf.mxu0
        %v977 = vadd.f32 %v905, %v976
        %978 = vmatmul.bf16.gmra.mxu0 %v858
        %v979 = vpop.f32.mrf.mxu0
        %v980 = vadd.f32 %v905, %v979
        %v981 = vpop.f32.mrf.mxu0
        %v982 = vadd.f32 %v905, %v981
        %983 = vmatmul.bf16.gmra.mxu0 %v859
        %v984 = vpop.f32.mrf.mxu0
        %v985 = vadd.f32 %v905, %v984
        %v986 = vpop.f32.mrf.mxu0
        %v987 = vadd.f32 %v905, %v986
        %988 = vmatmul.bf16.gmra.mxu0 %v860
        %v989 = vpop.f32.mrf.mxu0
        %v990 = vadd.f32 %v905, %v989
        %v991 = vpop.f32.mrf.mxu0
        %v992 = vadd.f32 %v905, %v991
        %993 = vmatmul.bf16.gmra.mxu0 %v861
        %v994 = vpop.f32.mrf.mxu0
        %v995 = vadd.f32 %v905, %v994
        %v996 = vpop.f32.mrf.mxu0
        %v997 = vadd.f32 %v905, %v996
        %998 = vmatmul.bf16.gmra.mxu0 %v862
        %v999 = vpop.f32.mrf.mxu0
        %v1000 = vadd.f32 %v905, %v999
        %v1001 = vpop.f32.mrf.mxu0
        %v1002 = vadd.f32 %v905, %v1001
        %1003 = vmatmul.bf16.gmra.mxu0 %v863
        %v1004 = vpop.f32.mrf.mxu0
        %v1005 = vadd.f32 %v905, %v1004
        %v1006 = vpop.f32.mrf.mxu0
        %v1007 = vadd.f32 %v905, %v1006
        %1008 = vmatmul.bf16.gmra.mxu0 %v864
        %v1009 = vpop.f32.mrf.mxu0
        %v1010 = vadd.f32 %v905, %v1009
        %v1011 = vpop.f32.mrf.mxu0
        %v1012 = vadd.f32 %v905, %v1011
        %1013 = vmatmul.bf16.gmra.mxu0 %v865
        %v1014 = vpop.f32.mrf.mxu0
        %v1015 = vadd.f32 %v905, %v1014
        %v1016 = vpop.f32.mrf.mxu0
        %v1017 = vadd.f32 %v905, %v1016
        %1018 = vmatmul.bf16.gmra.mxu0 %v866
        %v1019 = vpop.f32.mrf.mxu0
        %v1020 = vadd.f32 %v905, %v1019
        %v1021 = vpop.f32.mrf.mxu0
        %v1022 = vadd.f32 %v905, %v1021
        %1023 = vmatmul.bf16.gmra.mxu0 %v867
        %v1024 = vpop.f32.mrf.mxu0
        %v1025 = vadd.f32 %v905, %v1024
        %v1026 = vpop.f32.mrf.mxu0
        %v1027 = vadd.f32 %v905, %v1026
        %1028 = vmatmul.bf16.gmra.mxu0 %v868
        %v1029 = vpop.f32.mrf.mxu0
        %v1030 = vadd.f32 %v905, %v1029
        %v1031 = vpop.f32.mrf.mxu0
        %v1032 = vadd.f32 %v905, %v1031
        %1033 = vmatmul.bf16.gmra.mxu0 %v869
        %v1034 = vpop.f32.mrf.mxu0
        %v1035 = vadd.f32 %v905, %v1034
        %v1036 = vpop.f32.mrf.mxu0
        %v1037 = vadd.f32 %v905, %v1036
        %1038 = vmatmul.bf16.gmra.mxu0 %v870
        %v1039 = vpop.f32.mrf.mxu0
        %v1040 = vadd.f32 %v905, %v1039
        %v1041 = vpop.f32.mrf.mxu0
        %v1042 = vadd.f32 %v905, %v1041
        %1043 = vmatmul.bf16.gmra.mxu0 %v871
        %v1044 = vpop.f32.mrf.mxu0
        %v1045 = vadd.f32 %v905, %v1044
        %v1046 = vpop.f32.mrf.mxu0
        %v1047 = vadd.f32 %v905, %v1046
        %1048 = vmatmul.bf16.gmra.mxu0 %v872
        %v1049 = vpop.f32.mrf.mxu0
        %v1050 = vadd.f32 %v905, %v1049
        %v1051 = vpop.f32.mrf.mxu0
        %v1052 = vadd.f32 %v905, %v1051
        %1053 = vmatmul.bf16.gmra.mxu0 %v873
        %v1054 = vpop.f32.mrf.mxu0
        %v1055 = vadd.f32 %v905, %v1054
        %v1056 = vpop.f32.mrf.mxu0
        %v1057 = vadd.f32 %v905, %v1056
        %1058 = vmatmul.bf16.gmra.mxu0 %v874
        %v1059 = vpop.f32.mrf.mxu0
        %v1060 = vadd.f32 %v905, %v1059
        %v1061 = vpop.f32.mrf.mxu0
        %v1062 = vadd.f32 %v905, %v1061
        %1063 = vmatmul.bf16.gmra.mxu0 %v875
        %v1064 = vpop.f32.mrf.mxu0
        %v1065 = vadd.f32 %v905, %v1064
        %v1066 = vpop.f32.mrf.mxu0
        %v1067 = vadd.f32 %v905, %v1066
        %1068 = vmatmul.bf16.gmra.mxu0 %v876
        %v1069 = vpop.f32.mrf.mxu0
        %v1070 = vadd.f32 %v905, %v1069
        %v1071 = vpop.f32.mrf.mxu0
        %v1072 = vadd.f32 %v905, %v1071
        %1073 = vmatmul.bf16.gmra.mxu0 %v877
        %v1074 = vpop.f32.mrf.mxu0
        %v1075 = vadd.f32 %v905, %v1074
        %v1076 = vpop.f32.mrf.mxu0
        %v1077 = vadd.f32 %v905, %v1076
        %1078 = vmatmul.bf16.gmra.mxu0 %v878
        %v1079 = vpop.f32.mrf.mxu0
        %v1080 = vadd.f32 %v905, %v1079
        %v1081 = vpop.f32.mrf.mxu0
        %v1082 = vadd.f32 %v905, %v1081
        %1083 = vmatmul.bf16.gmra.mxu0 %v879
        %v1084 = vpop.f32.mrf.mxu0
        %v1085 = vadd.f32 %v905, %v1084
        %v1086 = vpop.f32.mrf.mxu0
        %v1087 = vadd.f32 %v905, %v1086
        %1088 = vmatmul.bf16.gmra.mxu0 %v880
        %v1089 = vpop.f32.mrf.mxu0
        %v1090 = vadd.f32 %v905, %v1089
        %v1091 = vpop.f32.mrf.mxu0
        %v1092 = vadd.f32 %v905, %v1091
        %1093 = vmatmul.bf16.gmra.mxu0 %v881
        %v1094 = vpop.f32.mrf.mxu0
        %v1095 = vadd.f32 %v905, %v1094
        %v1096 = vpop.f32.mrf.mxu0
        %v1097 = vadd.f32 %v905, %v1096
        %1098 = vmatmul.bf16.gmra.mxu0 %v882
        %v1099 = vpop.f32.mrf.mxu0
        %v1100 = vadd.f32 %v905, %v1099
        %v1101 = vpop.f32.mrf.mxu0
        %v1102 = vadd.f32 %v905, %v1101
        %1103 = vmatmul.bf16.gmra.mxu0 %v883
        %v1104 = vpop.f32.mrf.mxu0
        %v1105 = vadd.f32 %v905, %v1104
        %v1106 = vpop.f32.mrf.mxu0
        %v1107 = vadd.f32 %v905, %v1106
        %1108 = vmatmul.bf16.gmra.mxu0 %v884
        %v1109 = vpop.f32.mrf.mxu0
        %v1110 = vadd.f32 %v905, %v1109
        %v1111 = vpop.f32.mrf.mxu0
        %v1112 = vadd.f32 %v905, %v1111
        %1113 = vmatmul.bf16.gmra.mxu0 %v885
        %v1114 = vpop.f32.mrf.mxu0
        %v1115 = vadd.f32 %v905, %v1114
        %v1116 = vpop.f32.mrf.mxu0
        %v1117 = vadd.f32 %v905, %v1116
        %1118 = vmatmul.bf16.gmra.mxu0 %v886
        %v1119 = vpop.f32.mrf.mxu0
        %v1120 = vadd.f32 %v905, %v1119
        %v1121 = vpop.f32.mrf.mxu0
        %v1122 = vadd.f32 %v905, %v1121
        %1123 = vdwg.mxu0
        %v1124 = vmax.f32 %v965, 0.0
        %v1125 = vmax.f32 %v967, 0.0
        %v1126 = vmax.f32 %v970, 0.0
        %v1127 = vmax.f32 %v972, 0.0
        %v1128 = vmax.f32 %v975, 0.0
        %v1129 = vmax.f32 %v977, 0.0
        %v1130 = vmax.f32 %v980, 0.0
        %v1131 = vmax.f32 %v982, 0.0
        %v1132 = vmax.f32 %v985, 0.0
        %v1133 = vmax.f32 %v987, 0.0
        %v1134 = vmax.f32 %v990, 0.0
        %v1135 = vmax.f32 %v992, 0.0
        %v1136 = vmax.f32 %v995, 0.0
        %v1137 = vmax.f32 %v997, 0.0
        %v1138 = vmax.f32 %v1000, 0.0
        %v1139 = vmax.f32 %v1002, 0.0
        %v1140 = vmax.f32 %v1005, 0.0
        %v1141 = vmax.f32 %v1007, 0.0
        %v1142 = vmax.f32 %v1010, 0.0
        %v1143 = vmax.f32 %v1012, 0.0
        %v1144 = vmax.f32 %v1015, 0.0
        %v1145 = vmax.f32 %v1017, 0.0
        %v1146 = vmax.f32 %v1020, 0.0
        %v1147 = vmax.f32 %v1022, 0.0
        %v1148 = vmax.f32 %v1025, 0.0
        %v1149 = vmax.f32 %v1027, 0.0
        %v1150 = vmax.f32 %v1030, 0.0
        %v1151 = vmax.f32 %v1032, 0.0
        %v1152 = vmax.f32 %v1035, 0.0
        %v1153 = vmax.f32 %v1037, 0.0
        %v1154 = vmax.f32 %v1040, 0.0
        %v1155 = vmax.f32 %v1042, 0.0
        %v1156 = vmax.f32 %v1045, 0.0
        %v1157 = vmax.f32 %v1047, 0.0
        %v1158 = vmax.f32 %v1050, 0.0
        %v1159 = vmax.f32 %v1052, 0.0
        %v1160 = vmax.f32 %v1055, 0.0
        %v1161 = vmax.f32 %v1057, 0.0
        %v1162 = vmax.f32 %v1060, 0.0
        %v1163 = vmax.f32 %v1062, 0.0
        %v1164 = vmax.f32 %v1065, 0.0
        %v1165 = vmax.f32 %v1067, 0.0
        %v1166 = vmax.f32 %v1070, 0.0
        %v1167 = vmax.f32 %v1072, 0.0
        %v1168 = vmax.f32 %v1075, 0.0
        %v1169 = vmax.f32 %v1077, 0.0
        %v1170 = vmax.f32 %v1080, 0.0
        %v1171 = vmax.f32 %v1082, 0.0
        %v1172 = vmax.f32 %v1085, 0.0
        %v1173 = vmax.f32 %v1087, 0.0
        %v1174 = vmax.f32 %v1090, 0.0
        %v1175 = vmax.f32 %v1092, 0.0
        %v1176 = vmax.f32 %v1095, 0.0
        %v1177 = vmax.f32 %v1097, 0.0
        %v1178 = vmax.f32 %v1100, 0.0
        %v1179 = vmax.f32 %v1102, 0.0
        %v1180 = vmax.f32 %v1105, 0.0
        %v1181 = vmax.f32 %v1107, 0.0
        %v1182 = vmax.f32 %v1110, 0.0
        %v1183 = vmax.f32 %v1112, 0.0
        %v1184 = vmax.f32 %v1115, 0.0
        %v1185 = vmax.f32 %v1117, 0.0
        %v1186 = vmax.f32 %v1120, 0.0
        %v1187 = vmax.f32 %v1122, 0.0
        %v1188 = vpack.c.bf16 %v1125, %v1124
        %v1189 = vpack.c.bf16 %v1127, %v1126
        %v1190 = vpack.c.bf16 %v1129, %v1128
        %v1191 = vpack.c.bf16 %v1131, %v1130
        %v1192 = vpack.c.bf16 %v1133, %v1132
        %v1193 = vpack.c.bf16 %v1135, %v1134
        %v1194 = vpack.c.bf16 %v1137, %v1136
        %v1195 = vpack.c.bf16 %v1139, %v1138
        %v1196 = vpack.c.bf16 %v1141, %v1140
        %v1197 = vpack.c.bf16 %v1143, %v1142
        %v1198 = vpack.c.bf16 %v1145, %v1144
        %v1199 = vpack.c.bf16 %v1147, %v1146
        %v1200 = vpack.c.bf16 %v1149, %v1148
        %v1201 = vpack.c.bf16 %v1151, %v1150
        %v1202 = vpack.c.bf16 %v1153, %v1152
        %v1203 = vpack.c.bf16 %v1155, %v1154
        %v1204 = vpack.c.bf16 %v1157, %v1156
        %v1205 = vpack.c.bf16 %v1159, %v1158
        %v1206 = vpack.c.bf16 %v1161, %v1160
        %v1207 = vpack.c.bf16 %v1163, %v1162
        %v1208 = vpack.c.bf16 %v1165, %v1164
        %v1209 = vpack.c.bf16 %v1167, %v1166
        %v1210 = vpack.c.bf16 %v1169, %v1168
        %v1211 = vpack.c.bf16 %v1171, %v1170
        %v1212 = vpack.c.bf16 %v1173, %v1172
        %v1213 = vpack.c.bf16 %v1175, %v1174
        %v1214 = vpack.c.bf16 %v1177, %v1176
        %v1215 = vpack.c.bf16 %v1179, %v1178
        %v1216 = vpack.c.bf16 %v1181, %v1180
        %v1217 = vpack.c.bf16 %v1183, %v1182
        %v1218 = vpack.c.bf16 %v1185, %v1184
        %v1219 = vpack.c.bf16 %v1187, %v1186
        %v1220 = vld [vmem:[%s5] sm:$0xf]
        %v1221 = vld [vmem:[%s5 + $0x4] sm:$0xf]
        %v1222 = vld [vmem:[%s5 + $0x8] sm:$0xf]
        %v1223 = vld [vmem:[%s5 + $0xc] sm:$0xf]
        %v1224 = vld [vmem:[%s5 + $0x10] sm:$0xf]
        %v1225 = vld [vmem:[%s5 + $0x14] sm:$0xf]
        %v1226 = vld [vmem:[%s5 + $0x18] sm:$0xf]
        %v1227 = vld [vmem:[%s5 + $0x1c] sm:$0xf]
        %v1228 = vld [vmem:[%s5 + $0x20] sm:$0xf]
        %v1229 = vld [vmem:[%s5 + $0x24] sm:$0xf]
        %v1230 = vld [vmem:[%s5 + $0x28] sm:$0xf]
        %v1231 = vld [vmem:[%s5 + $0x2c] sm:$0xf]
        %v1232 = vld [vmem:[%s5 + $0x30] sm:$0xf]
        %v1233 = vld [vmem:[%s5 + $0x34] sm:$0xf]
        %v1234 = vld [vmem:[%s5 + $0x38] sm:$0xf]
        %v1235 = vld [vmem:[%s5 + $0x3c] sm:$0xf]
        %v1236 = vld [vmem:[%s6] sm:$0x1]
        %v1238 = vperm.slane %v1236, 0
        %v1256 = vunpack.c.l.b16 %v1220
        %v1257 = vunpack.c.l.b16 %v1221
        %v1258 = vunpack.c.l.b16 %v1222
        %v1259 = vunpack.c.l.b16 %v1223
        %v1260 = vunpack.c.l.b16 %v1224
        %v1261 = vunpack.c.l.b16 %v1225
        %v1262 = vunpack.c.l.b16 %v1226
        %v1263 = vunpack.c.l.b16 %v1227
        %v1264 = vunpack.c.l.b16 %v1228
        %v1265 = vunpack.c.l.b16 %v1229
        %v1266 = vunpack.c.l.b16 %v1230
        %v1267 = vunpack.c.l.b16 %v1231
        %v1268 = vunpack.c.l.b16 %v1232
        %v1269 = vunpack.c.l.b16 %v1233
        %v1270 = vunpack.c.l.b16 %v1234
        %v1271 = vunpack.c.l.b16 %v1235
        %v1272 = vpack.c.b16 %v1257, %v1256
        %v1273 = vpack.c.b16 %v1259, %v1258
        %v1274 = vpack.c.b16 %v1261, %v1260
        %v1275 = vpack.c.b16 %v1263, %v1262
        %v1276 = vpack.c.b16 %v1265, %v1264
        %v1277 = vpack.c.b16 %v1267, %v1266
        %v1278 = vpack.c.b16 %v1269, %v1268
        %v1279 = vpack.c.b16 %v1271, %v1270
        %1288 = vmatpush.bf16.msra.mxu0 %v1279
        %1289 = vmatpush.bf16.msra.mxu0 %v1278
        %1290 = vmatpush.bf16.msra.mxu0 %v1277
        %1291 = vmatpush.bf16.msra.mxu0 %v1276
        %1292 = vmatpush.bf16.msra.mxu0 %v1275
        %1293 = vmatpush.bf16.msra.mxu0 %v1274
        %1294 = vmatpush.bf16.msra.mxu0 %v1273
        %1295 = vmatpush.bf16.msra.mxu0 %v1272
        %1296 = vmatmul.bf16.gmra.mxu0 %v1188
        %v1297 = vpop.f32.mrf.mxu0
        %v1298 = vadd.f32 %v1238, %v1297
        %v1299 = vpop.f32.mrf.mxu0
        %v1300 = vadd.f32 %v1238, %v1299
        %1301 = vmatmul.bf16.gmra.mxu0 %v1189
        %v1302 = vpop.f32.mrf.mxu0
        %v1303 = vadd.f32 %v1238, %v1302
        %v1304 = vpop.f32.mrf.mxu0
        %v1305 = vadd.f32 %v1238, %v1304
        %1306 = vmatmul.bf16.gmra.mxu0 %v1190
        %v1307 = vpop.f32.mrf.mxu0
        %v1308 = vadd.f32 %v1238, %v1307
        %v1309 = vpop.f32.mrf.mxu0
        %v1310 = vadd.f32 %v1238, %v1309
        %1311 = vmatmul.bf16.gmra.mxu0 %v1191
        %v1312 = vpop.f32.mrf.mxu0
        %v1313 = vadd.f32 %v1238, %v1312
        %v1314 = vpop.f32.mrf.mxu0
        %v1315 = vadd.f32 %v1238, %v1314
        %1316 = vmatmul.bf16.gmra.mxu0 %v1192
        %v1317 = vpop.f32.mrf.mxu0
        %v1318 = vadd.f32 %v1238, %v1317
        %v1319 = vpop.f32.mrf.mxu0
        %v1320 = vadd.f32 %v1238, %v1319
        %1321 = vmatmul.bf16.gmra.mxu0 %v1193
        %v1322 = vpop.f32.mrf.mxu0
        %v1323 = vadd.f32 %v1238, %v1322
        %v1324 = vpop.f32.mrf.mxu0
        %v1325 = vadd.f32 %v1238, %v1324
        %1326 = vmatmul.bf16.gmra.mxu0 %v1194
        %v1327 = vpop.f32.mrf.mxu0
        %v1328 = vadd.f32 %v1238, %v1327
        %v1329 = vpop.f32.mrf.mxu0
        %v1330 = vadd.f32 %v1238, %v1329
        %1331 = vmatmul.bf16.gmra.mxu0 %v1195
        %v1332 = vpop.f32.mrf.mxu0
        %v1333 = vadd.f32 %v1238, %v1332
        %v1334 = vpop.f32.mrf.mxu0
        %v1335 = vadd.f32 %v1238, %v1334
        %1336 = vmatmul.bf16.gmra.mxu0 %v1196
        %v1337 = vpop.f32.mrf.mxu0
        %v1338 = vadd.f32 %v1238, %v1337
        %v1339 = vpop.f32.mrf.mxu0
        %v1340 = vadd.f32 %v1238, %v1339
        %1341 = vmatmul.bf16.gmra.mxu0 %v1197
        %v1342 = vpop.f32.mrf.mxu0
        %v1343 = vadd.f32 %v1238, %v1342
        %v1344 = vpop.f32.mrf.mxu0
        %v1345 = vadd.f32 %v1238, %v1344
        %1346 = vmatmul.bf16.gmra.mxu0 %v1198
        %v1347 = vpop.f32.mrf.mxu0
        %v1348 = vadd.f32 %v1238, %v1347
        %v1349 = vpop.f32.mrf.mxu0
        %v1350 = vadd.f32 %v1238, %v1349
        %1351 = vmatmul.bf16.gmra.mxu0 %v1199
        %v1352 = vpop.f32.mrf.mxu0
        %v1353 = vadd.f32 %v1238, %v1352
        %v1354 = vpop.f32.mrf.mxu0
        %v1355 = vadd.f32 %v1238, %v1354
        %1356 = vmatmul.bf16.gmra.mxu0 %v1200
        %v1357 = vpop.f32.mrf.mxu0
        %v1358 = vadd.f32 %v1238, %v1357
        %v1359 = vpop.f32.mrf.mxu0
        %v1360 = vadd.f32 %v1238, %v1359
        %1361 = vmatmul.bf16.gmra.mxu0 %v1201
        %v1362 = vpop.f32.mrf.mxu0
        %v1363 = vadd.f32 %v1238, %v1362
        %v1364 = vpop.f32.mrf.mxu0
        %v1365 = vadd.f32 %v1238, %v1364
        %1366 = vmatmul.bf16.gmra.mxu0 %v1202
        %v1367 = vpop.f32.mrf.mxu0
        %v1368 = vadd.f32 %v1238, %v1367
        %v1369 = vpop.f32.mrf.mxu0
        %v1370 = vadd.f32 %v1238, %v1369
        %1371 = vmatmul.bf16.gmra.mxu0 %v1203
        %v1372 = vpop.f32.mrf.mxu0
        %v1373 = vadd.f32 %v1238, %v1372
        %v1374 = vpop.f32.mrf.mxu0
        %v1375 = vadd.f32 %v1238, %v1374
        %1376 = vmatmul.bf16.gmra.mxu0 %v1204
        %v1377 = vpop.f32.mrf.mxu0
        %v1378 = vadd.f32 %v1238, %v1377
        %v1379 = vpop.f32.mrf.mxu0
        %v1380 = vadd.f32 %v1238, %v1379
        %1381 = vmatmul.bf16.gmra.mxu0 %v1205
        %v1382 = vpop.f32.mrf.mxu0
        %v1383 = vadd.f32 %v1238, %v1382
        %v1384 = vpop.f32.mrf.mxu0
        %v1385 = vadd.f32 %v1238, %v1384
        %1386 = vmatmul.bf16.gmra.mxu0 %v1206
        %v1387 = vpop.f32.mrf.mxu0
        %v1388 = vadd.f32 %v1238, %v1387
        %v1389 = vpop.f32.mrf.mxu0
        %v1390 = vadd.f32 %v1238, %v1389
        %1391 = vmatmul.bf16.gmra.mxu0 %v1207
        %v1392 = vpop.f32.mrf.mxu0
        %v1393 = vadd.f32 %v1238, %v1392
        %v1394 = vpop.f32.mrf.mxu0
        %v1395 = vadd.f32 %v1238, %v1394
        %1396 = vmatmul.bf16.gmra.mxu0 %v1208
        %v1397 = vpop.f32.mrf.mxu0
        %v1398 = vadd.f32 %v1238, %v1397
        %v1399 = vpop.f32.mrf.mxu0
        %v1400 = vadd.f32 %v1238, %v1399
        %1401 = vmatmul.bf16.gmra.mxu0 %v1209
        %v1402 = vpop.f32.mrf.mxu0
        %v1403 = vadd.f32 %v1238, %v1402
        %v1404 = vpop.f32.mrf.mxu0
        %v1405 = vadd.f32 %v1238, %v1404
        %1406 = vmatmul.bf16.gmra.mxu0 %v1210
        %v1407 = vpop.f32.mrf.mxu0
        %v1408 = vadd.f32 %v1238, %v1407
        %v1409 = vpop.f32.mrf.mxu0
        %v1410 = vadd.f32 %v1238, %v1409
        %1411 = vmatmul.bf16.gmra.mxu0 %v1211
        %v1412 = vpop.f32.mrf.mxu0
        %v1413 = vadd.f32 %v1238, %v1412
        %v1414 = vpop.f32.mrf.mxu0
        %v1415 = vadd.f32 %v1238, %v1414
        %1416 = vmatmul.bf16.gmra.mxu0 %v1212
        %v1417 = vpop.f32.mrf.mxu0
        %v1418 = vadd.f32 %v1238, %v1417
        %v1419 = vpop.f32.mrf.mxu0
        %v1420 = vadd.f32 %v1238, %v1419
        %1421 = vmatmul.bf16.gmra.mxu0 %v1213
        %v1422 = vpop.f32.mrf.mxu0
        %v1423 = vadd.f32 %v1238, %v1422
        %v1424 = vpop.f32.mrf.mxu0
        %v1425 = vadd.f32 %v1238, %v1424
        %1426 = vmatmul.bf16.gmra.mxu0 %v1214
        %v1427 = vpop.f32.mrf.mxu0
        %v1428 = vadd.f32 %v1238, %v1427
        %v1429 = vpop.f32.mrf.mxu0
        %v1430 = vadd.f32 %v1238, %v1429
        %1431 = vmatmul.bf16.gmra.mxu0 %v1215
        %v1432 = vpop.f32.mrf.mxu0
        %v1433 = vadd.f32 %v1238, %v1432
        %v1434 = vpop.f32.mrf.mxu0
        %v1435 = vadd.f32 %v1238, %v1434
        %1436 = vmatmul.bf16.gmra.mxu0 %v1216
        %v1437 = vpop.f32.mrf.mxu0
        %v1438 = vadd.f32 %v1238, %v1437
        %v1439 = vpop.f32.mrf.mxu0
        %v1440 = vadd.f32 %v1238, %v1439
        %1441 = vmatmul.bf16.gmra.mxu0 %v1217
        %v1442 = vpop.f32.mrf.mxu0
        %v1443 = vadd.f32 %v1238, %v1442
        %v1444 = vpop.f32.mrf.mxu0
        %v1445 = vadd.f32 %v1238, %v1444
        %1446 = vmatmul.bf16.gmra.mxu0 %v1218
        %v1447 = vpop.f32.mrf.mxu0
        %v1448 = vadd.f32 %v1238, %v1447
        %v1449 = vpop.f32.mrf.mxu0
        %v1450 = vadd.f32 %v1238, %v1449
        %1451 = vmatmul.bf16.gmra.mxu0 %v1219
        %v1452 = vpop.f32.mrf.mxu0
        %v1453 = vadd.f32 %v1238, %v1452
        %v1454 = vpop.f32.mrf.mxu0
        %v1455 = vadd.f32 %v1238, %v1454
        %1456 = vdwg.mxu0
        %1457 = vst [vmem:[%s272] sm:$0xff] %v1298
        %1458 = vst [vmem:[%s272 + $0x8] sm:$0xff] %v1300
        %1459 = vst [vmem:[%s272 + $0x10] sm:$0xff] %v1303
        %1460 = vst [vmem:[%s272 + $0x18] sm:$0xff] %v1305
        %1461 = vst [vmem:[%s272 + $0x20] sm:$0xff] %v1308
        %1462 = vst [vmem:[%s272 + $0x28] sm:$0xff] %v1310
        %1463 = vst [vmem:[%s272 + $0x30] sm:$0xff] %v1313
        %1464 = vst [vmem:[%s272 + $0x38] sm:$0xff] %v1315
        %1465 = vst [vmem:[%s272 + $0x40] sm:$0xff] %v1318
        %1466 = vst [vmem:[%s272 + $0x48] sm:$0xff] %v1320
        %1467 = vst [vmem:[%s272 + $0x50] sm:$0xff] %v1323
        %1468 = vst [vmem:[%s272 + $0x58] sm:$0xff] %v1325
        %1469 = vst [vmem:[%s272 + $0x60] sm:$0xff] %v1328
        %1470 = vst [vmem:[%s272 + $0x68] sm:$0xff] %v1330
        %1471 = vst [vmem:[%s272 + $0x70] sm:$0xff] %v1333
        %1472 = vst [vmem:[%s272 + $0x78] sm:$0xff] %v1335
        %1473 = vst [vmem:[%s272 + $0x80] sm:$0xff] %v1338
        %1474 = vst [vmem:[%s272 + $0x88] sm:$0xff] %v1340
        %1475 = vst [vmem:[%s272 + $0x90] sm:$0xff] %v1343
        %1476 = vst [vmem:[%s272 + $0x98] sm:$0xff] %v1345
        %1477 = vst [vmem:[%s272 + $0xa0] sm:$0xff] %v1348
        %1478 = vst [vmem:[%s272 + $0xa8] sm:$0xff] %v1350
        %1479 = vst [vmem:[%s272 + $0xb0] sm:$0xff] %v1353
        %1480 = vst [vmem:[%s272 + $0xb8] sm:$0xff] %v1355
        %1481 = vst [vmem:[%s272 + $0xc0] sm:$0xff] %v1358
        %1482 = vst [vmem:[%s272 + $0xc8] sm:$0xff] %v1360
        %1483 = vst [vmem:[%s272 + $0xd0] sm:$0xff] %v1363
        %1484 = vst [vmem:[%s272 + $0xd8] sm:$0xff] %v1365
        %1485 = vst [vmem:[%s272 + $0xe0] sm:$0xff] %v1368
        %1486 = vst [vmem:[%s272 + $0xe8] sm:$0xff] %v1370
        %1487 = vst [vmem:[%s272 + $0xf0] sm:$0xff] %v1373
        %1488 = vst [vmem:[%s272 + $0xf8] sm:$0xff] %v1375
        %1489 = vst [vmem:[%s272 + $0x100] sm:$0xff] %v1378
        %1490 = vst [vmem:[%s272 + $0x108] sm:$0xff] %v1380
        %1491 = vst [vmem:[%s272 + $0x110] sm:$0xff] %v1383
        %1492 = vst [vmem:[%s272 + $0x118] sm:$0xff] %v1385
        %1493 = vst [vmem:[%s272 + $0x120] sm:$0xff] %v1388
        %1494 = vst [vmem:[%s272 + $0x128] sm:$0xff] %v1390
        %1495 = vst [vmem:[%s272 + $0x130] sm:$0xff] %v1393
        %1496 = vst [vmem:[%s272 + $0x138] sm:$0xff] %v1395
        %1497 = vst [vmem:[%s272 + $0x140] sm:$0xff] %v1398
        %1498 = vst [vmem:[%s272 + $0x148] sm:$0xff] %v1400
        %1499 = vst [vmem:[%s272 + $0x150] sm:$0xff] %v1403
        %1500 = vst [vmem:[%s272 + $0x158] sm:$0xff] %v1405
        %1501 = vst [vmem:[%s272 + $0x160] sm:$0xff] %v1408
        %1502 = vst [vmem:[%s272 + $0x168] sm:$0xff] %v1410
        %1503 = vst [vmem:[%s272 + $0x170] sm:$0xff] %v1413
        %1504 = vst [vmem:[%s272 + $0x178] sm:$0xff] %v1415
        %1505 = vst [vmem:[%s272 + $0x180] sm:$0xff] %v1418
        %1506 = vst [vmem:[%s272 + $0x188] sm:$0xff] %v1420
        %1507 = vst [vmem:[%s272 + $0x190] sm:$0xff] %v1423
        %1508 = vst [vmem:[%s272 + $0x198] sm:$0xff] %v1425
        %1509 = vst [vmem:[%s272 + $0x1a0] sm:$0xff] %v1428
        %1510 = vst [vmem:[%s272 + $0x1a8] sm:$0xff] %v1430
        %1511 = vst [vmem:[%s272 + $0x1b0] sm:$0xff] %v1433
        %1512 = vst [vmem:[%s272 + $0x1b8] sm:$0xff] %v1435
        %1513 = vst [vmem:[%s272 + $0x1c0] sm:$0xff] %v1438
        %1514 = vst [vmem:[%s272 + $0x1c8] sm:$0xff] %v1440
        %1515 = vst [vmem:[%s272 + $0x1d0] sm:$0xff] %v1443
        %1516 = vst [vmem:[%s272 + $0x1d8] sm:$0xff] %v1445
        %1517 = vst [vmem:[%s272 + $0x1e0] sm:$0xff] %v1448
        %1518 = vst [vmem:[%s272 + $0x1e8] sm:$0xff] %v1450
        %1519 = vst [vmem:[%s272 + $0x1f0] sm:$0xff] %v1453
        %1520 = vst [vmem:[%s272 + $0x1f8] sm:$0xff] %v1455
        %s1521 = sand.u32 %s181, 1
        %s1522 = scalar_lea.sflag [#allocation3], %s1521
        %s1523 = sand.u32 %s181, 1
        %s1524 = smul.addr %s1523, 512
        %s1525 = scalar_lea.vmem [#allocation2], %s1524
        // Predicated region
        $region49: #{tpu_custom_call.1} parent=47 // pred_check
          %p1526 = pneg %p191
        $region50: #{tpu_custom_call.1} parent=47 // pred_check_branch
          %1528 = sbr.rel (%p1526) target = $region52
        $region51: #{tpu_custom_call.1} parent=47 // pred_region
          %s1529 = smul.u32 64, %s21
          %1531 = vsyncadd %s1522, 0
          %s1532 = smul.addr %s1529, 8
          %s1533 = scalar_lea.hbm %s7, %s1532
          %s1534 = sshll.u32 %s1525, 4
          %s1535 = int_to_ptr.vmem [resolvable:$true] %s1534
          %s1536 = sshll.u32 %s1533, 4
          %s1537 = int_to_ptr.hbm [resolvable:$true] %s1536
          %1542 = dma.vmem_to_hbm [thread:$0]  %s1535, 8192, %s1537, %s1522, 128, 128, 8
        $region52: #{tpu_custom_call.1} parent=47 // pred_fallthru
          _
      $region48: #{tpu_custom_call.1} parent=5 // pred_fallthru
        _
      %p1543 = scmp.le.s32.totalorder 2, %s16
      // Predicated region
      $region53: #{tpu_custom_call.1} parent=5 // pred_check
        %p1544 = pneg %p1543
      $region54: #{tpu_custom_call.1} parent=5 // pred_check_branch
        %1546 = sbr.rel (%p1544) target = $region56
      $region55: #{tpu_custom_call.1} parent=5 // pred_region
        %s1547 = ssub.s32 %s16, 2
        // Predicated region
        $region57: #{tpu_custom_call.1} parent=55 // pred_check
          %p1548 = pneg %p197
        $region58: #{tpu_custom_call.1} parent=55 // pred_check_branch
          %1550 = sbr.rel (%p1548) target = $region60
        $region59: #{tpu_custom_call.1} parent=55 // pred_region
          %s1551 = sand.u32 %s182, 1
          %s1552 = scalar_lea.sflag [#allocation3], %s1551
          %s1553 = sand.u32 %s182, 1
          %s1554 = smul.addr %s1553, 512
          %s1555 = scalar_lea.vmem [#allocation2], %s1554
          %1557 = dma.done %s1552, 8192
        $region60: #{tpu_custom_call.1} parent=55 // pred_fallthru
          _
      $region56: #{tpu_custom_call.1} parent=5 // pred_fallthru
        _
    $region6: #{tpu_custom_call.1} parent=1 // loop_footer
      %s20 = sadd.s32 1, %s16
    $region7: #{tpu_custom_call.1} parent=1 // loop_footer_branch
      %15 = sbr.rel target = $region3
    $region8: #{tpu_custom_call.1} parent=1 // loop_exit
      _
    %1558 = vsyncpa [#allocation3], 1
    %s1559 = scalar_lea.sflag [#allocation3], 1
    %1560 = vsyncpa %s1559, 1

</llo_original>
